<compile_context>
chip_gen: v7x
topology: tpu7x:2x2x1
jax: 0.10.0
libtpu: 0.0.40
codegen_flags: <defaults>
</compile_context>

<pallas_src>
import jax
import jax.numpy as jnp
from jax.experimental import pallas as pl
from jax.experimental.pallas import tpu as pltpu

F32 = jnp.float32


def _vmem_spec():
    return pl.BlockSpec(memory_space=pltpu.MemorySpace.VMEM)


def _round_up(x, m):
    return (x + m - 1) // m * m


def _erf(x):
    # Abramowitz & Stegun 7.1.26 rational approximation (|err| < 1.5e-7), built
    # from exp/mul/add only so it lowers cleanly in Mosaic.
    # TODO(synk): not bit-exact vs PyTorch's erf-based GELU.
    ax = jnp.abs(x)
    t = 1.0 / (1.0 + 0.3275911 * ax)
    poly = t * (0.254829592 + t * (-0.284496736 + t * (1.421413741
            + t * (-1.453152027 + t * 1.061405429))))
    y = 1.0 - poly * jnp.exp(-ax * ax)
    return jnp.where(x >= 0, y, -y)


def _gelu_exact(x):
    return 0.5 * x * (1.0 + _erf(x * 0.7071067811865476))


# --------------------------- slab layouts (shared) ---------------------------

def _w_layout(view_dims, H, C, MH, FFN):
    """Weight slab: each matrix block padded to (round_up(rows,8), 128) lanes."""
    V = len(view_dims)
    D = sum(view_dims)
    entries = [
        ('pw1', D, V * MH),       # block-diag projector Linear-1
        ('pw2', V * MH, V * H),   # block-diag projector Linear-2
        ('gw1', H, V * MH),       # column-concat generator Linear-1 (shared input c)
        ('gw2', V * MH, D),       # block-diag generator Linear-2
        ('wqkv', H, 3 * H),       # fused Q/K/V
        ('wo', H, H),
        ('wf1', H, FFN),
        ('wf2', FFN, H),
        ('wp', H, H),
        ('wc', H, 128),           # classifier padded to a full lane tile
    ]
    offs, r = {}, 0
    for name, k, _n in entries:
        offs[name] = r
        r += _round_up(k, 8)
    return entries, offs, r


def _v_layout(V):
    """Vector slab: one (1,128) zero-padded row per bias / affine / embedding."""
    names = ['pb1', 'pg1', 'pbe1', 'pb2', 'pg2', 'pbe2',
             'gb1', 'gg1', 'gbe1', 'gb2', 'gg2', 'gbe2']
    names += [f'tok{i}' for i in range(V + 1)]
    names += ['ln0g', 'ln0b', 'bqkv', 'bo', 'ln1g', 'ln1b',
              'bf1', 'bf2', 'ln2g', 'ln2b', 'bp', 'bc']
    return names, {n: i for i, n in enumerate(names)}


def _out_layout(view_dims, H, C):
    """Output slab: [feat_0..feat_{V-1} | xm_0.. | xr_0.. | logits | zero-pad]."""
    V = len(view_dims)
    widths = [H] * V + list(view_dims) + list(view_dims) + [C]
    offs, o = [], 0
    for w in widths:
        offs.append(o)
        o += w
    return offs, o, _round_up(o, 128)


def _blockdiag(mats):
    K = sum(m.shape[0] for m in mats)
    N = sum(m.shape[1] for m in mats)
    out = jnp.zeros((K, N), F32)
    r = c = 0
    for m in mats:
        out = out.at[r:r + m.shape[0], c:c + m.shape[1]].set(m)
        r += m.shape[0]
        c += m.shape[1]
    return out


def _pad2d(m, rows, cols):
    return jnp.pad(m, ((0, rows - m.shape[0]), (0, cols - m.shape[1])))


# --------------------------- fused forward kernel ---------------------------

def make_fused_kernel(B, view_dims, H, C, MH, FFN, w_off, v_idx, out_used, out_total):
    V = len(view_dims)
    L = V + 1
    D = sum(view_dims)
    MH2 = V * MH
    H2 = V * H
    H3 = 3 * H

    def kernel(xin_ref, w_ref, vec_ref, out_ref):
        # ---- static slab slices (zero runtime cost for the slice itself) ----
        def mat(name, k, n):
            r = w_off[name]
            return w_ref[r:r + k, 0:n]

        def vec(name, n):
            i = v_idx[name]
            return vec_ref[i:i + 1, :][:, 0:n]

        x_cat = xin_ref[:, 0:D]                               # (B, sum d_i)
        smask = xin_ref[:, D:2 * D]                           # per-feature 0/1 mask
        s_col = [xin_ref[:, 2 * D + i:2 * D + i + 1] for i in range(V)]

        pw1, pw2 = mat('pw1', D, MH2), mat('pw2', MH2, H2)
        gw1, gw2 = mat('gw1', H, MH2), mat('gw2', MH2, D)
        wqkv, wo = mat('wqkv', H, H3), mat('wo', H, H)
        wf1, wf2 = mat('wf1', H, FFN), mat('wf2', FFN, H)
        wp, wc = mat('wp', H, H), mat('wc', H, 128)

        pb1, pg1, pbe1 = vec('pb1', MH2), vec('pg1', MH2), vec('pbe1', MH2)
        pb2, pg2, pbe2 = vec('pb2', H2), vec('pg2', H2), vec('pbe2', H2)
        gb1, gg1, gbe1 = vec('gb1', MH2), vec('gg1', MH2), vec('gbe1', MH2)
        gb2, gg2, gbe2 = vec('gb2', D), vec('gg2', D), vec('gbe2', D)
        tokb = [vec(f'tok{i}', H) for i in range(L)]
        ln0g, ln0b = vec('ln0g', H), vec('ln0b', H)
        bqkv, bo = vec('bqkv', H3), vec('bo', H)
        ln1g, ln1b = vec('ln1g', H), vec('ln1b', H)
        bf1, bf2 = vec('bf1', FFN), vec('bf2', H)
        ln2g, ln2b = vec('ln2g', H), vec('ln2b', H)
        bp_, bc = vec('bp', H), vec('bc', 128)

        # ---- helpers (rsqrt / reciprocal go to the EUP slot) ----
        def batchnorm(h, g, b, eps=1e-5):
            mu = jnp.mean(h, axis=0, keepdims=True)
            var = jnp.mean((h - mu) ** 2, axis=0, keepdims=True)
            return (h - mu) * jax.lax.rsqrt(var + eps) * g + b

        def layernorm(x, g, b, eps=1e-12):
            mu = jnp.mean(x, axis=-1, keepdims=True)
            var = jnp.mean((x - mu) ** 2, axis=-1, keepdims=True)
            return (x - mu) * jax.lax.rsqrt(var + eps) * g + b

        def l2norm(x):  # F.normalize: x / max(||x||, 1e-12)
            ss = jnp.sum(x * x, axis=-1, keepdims=True)
            return x * jax.lax.rsqrt(jnp.maximum(ss, 1e-24))

        def leaky(x):
            return jnp.where(x > 0, x, 0.2 * x)

        def proj_pass(x):
            # all V projector MLPs at once via block-diagonal weights; BN1d is
            # per-feature over the whole (un-tiled) batch -> exact.
            h = leaky(batchnorm(jnp.dot(x, pw1, preferred_element_type=F32) + pb1,
                                pg1, pbe1))
            return batchnorm(jnp.dot(h, pw2, preferred_element_type=F32) + pb2,
                             pg2, pbe2)                       # (B, V*H)

        # 1. project the original views
        xp = proj_pass(x_cat)

        # 2. masked mean over views present for each sample
        num = xp[:, 0:H] * s_col[0]
        den = s_col[0]
        for i in range(1, V):
            num = num + xp[:, i * H:(i + 1) * H] * s_col[i]
            den = den + s_col[i]
        c = num * pl.reciprocal(jnp.maximum(den, 1.0), approx=True)

        # 3. regenerate all views from the aggregate (one batched MLP)
        hg = leaky(batchnorm(jnp.dot(c, gw1, preferred_element_type=F32) + gb1,
                             gg1, gbe1))
        xr_cat = batchnorm(jnp.dot(hg, gw2, preferred_element_type=F32) + gb2,
                           gg2, gbe2)                         # (B, sum d_i)

        # 4/5. per-sample mix of original / generated; xm = row-L2-normalized mix
        x_mix = jnp.where(smask > 0, x_cat, xr_cat)
        xm, xr = [], []
        off = 0
        for d in view_dims:
            xm.append(l2norm(x_mix[:, off:off + d]))
            xr.append(xr_cat[:, off:off + d])                 # ReverseLayerF fwd == identity
            off += d

        # 6/8. re-project the (possibly imputed) views; features = F.normalize
        xp2 = proj_pass(x_mix)
        feats = [l2norm(xp2[:, i * H:(i + 1) * H]) for i in range(V)]

        # 7/9. single-layer single-head BERT encoder + pooler + classifier.
        # Tokens stacked to (L*B, H) so QKV is ONE matmul; the LxL attention
        # stays on the VPU; only the CLS token survives past attention (other
        # tokens' encoder outputs are unused by the returned values).
        tok = jnp.concatenate(
            [jnp.broadcast_to(tokb[0], (B, H))]
            + [xp2[:, i * H:(i + 1) * H] + tokb[i + 1] for i in range(V)], axis=0)
        h0 = layernorm(tok, ln0g, ln0b)                       # (L*B, H)
        qkv = jnp.dot(h0, wqkv, preferred_element_type=F32) + bqkv   # (L*B, 3H)

        q0 = qkv[0:B, 0:H]
        k = [qkv[i * B:(i + 1) * B, H:2 * H] for i in range(L)]
        v = [qkv[i * B:(i + 1) * B, 2 * H:3 * H] for i in range(L)]
        bias = [jnp.zeros((B, 1), F32)] + [(1.0 - s_col[i]) * (-1e9) for i in range(V)]
        scale = float(1.0 / (H ** 0.5))

        sc = [jnp.sum(q0 * k[j], axis=-1, keepdims=True) * scale + bias[j]
              for j in range(L)]
        m = sc[0]
        for j in range(1, L):
            m = jnp.maximum(m, sc[j])
        e = [jnp.exp(sc[j] - m) for j in range(L)]
        den_a = e[0]
        ctx = e[0] * v[0]
        for j in range(1, L):
            den_a = den_a + e[j]
            ctx = ctx + e[j] * v[j]
        ctx = ctx * pl.reciprocal(den_a, approx=True)

        attn0 = jnp.dot(ctx, wo, preferred_element_type=F32) + bo
        h1 = layernorm(h0[0:B, :] + attn0, ln1g, ln1b)
        ff = _gelu_exact(jnp.dot(h1, wf1, preferred_element_type=F32) + bf1)
        ff = jnp.dot(ff, wf2, preferred_element_type=F32) + bf2
        h2 = layernorm(h1 + ff, ln2g, ln2b)

        pooled = jnp.tanh(jnp.dot(h2, wp, preferred_element_type=F32) + bp_)
        logits = (jnp.dot(pooled, wc, preferred_element_type=F32) + bc)[:, 0:C]

        # ---- single lane-dense packed store (width = multiple of 128) ----
        pieces = feats + xm + xr + [logits]
        if out_total > out_used:
            pieces.append(jnp.zeros((B, out_total - out_used), F32))
        out_ref[...] = jnp.concatenate(pieces, axis=-1)

    return kernel


# ------------------------------ wrapper / glue ------------------------------

def model_forward(params, x_list, s):
    V = len(x_list)
    B = s.shape[0]
    H = params['cls'].shape[-1]
    C = params['classifier_w'].shape[1]
    MH = params['projectors'][0]['w1'].shape[1]
    FFN = params['bert']['wf1'].shape[1]
    view_dims = [int(x.shape[1]) for x in x_list]
    D = sum(view_dims)
    assert max(V * MH, V * H, 3 * H, D, FFN, C) <= 128, \
        "packed-slab layout assumes all feature widths fit in one 128-lane tile"

    proj = params['projectors']
    gen = params['generators']
    bt = params['bert']
    s_f = s.astype(F32)

    # ---- input slab: [x_0 | ... | x_{V-1} | per-feature mask | s] ----
    s_exp = jnp.concatenate(
        [jnp.broadcast_to(s_f[:, i:i + 1], (B, view_dims[i])) for i in range(V)], axis=1)
    xin = jnp.concatenate([x.astype(F32) for x in x_list] + [s_exp, s_f], axis=1)

    # ---- weight slab: block-diag / concatenated matrices, 128-lane padded ----
    entries, w_off, _w_rows = _w_layout(view_dims, H, C, MH, FFN)
    mats = {
        'pw1': _blockdiag([p['w1'] for p in proj]),
        'pw2': _blockdiag([p['w2'] for p in proj]),
        'gw1': jnp.concatenate([g['w1'] for g in gen], axis=1),
        'gw2': _blockdiag([g['w2'] for g in gen]),
        'wqkv': jnp.concatenate([bt['wq'], bt['wk'], bt['wv']], axis=1),
        'wo': bt['wo'], 'wf1': bt['wf1'], 'wf2': bt['wf2'], 'wp': bt['wp'],
        'wc': params['classifier_w'],
    }
    w_slab = jnp.concatenate(
        [_pad2d(mats[name], _round_up(k, 8), 128) for name, k, _n in entries], axis=0)

    # ---- vector slab: biases / BN+LN affines / token+position embeddings ----
    v_names, v_idx = _v_layout(V)

    def catv(key, plist):
        return jnp.concatenate([p[key] for p in plist], axis=1)

    emb = bt['tok_emb'] + bt['pos_emb']                       # (V+1, H)
    vec_vals = {
        'pb1': catv('b1', proj), 'pg1': catv('g1', proj), 'pbe1': catv('be1', proj),
        'pb2': catv('b2', proj), 'pg2': catv('g2', proj), 'pbe2': catv('be2', proj),
        'gb1': catv('b1', gen), 'gg1': catv('g1', gen), 'gbe1': catv('be1', gen),
        'gb2': catv('b2', gen), 'gg2': catv('g2', gen), 'gbe2': catv('be2', gen),
        'tok0': params['cls'].reshape(1, H) + emb[0:1],
        'ln0g': bt['ln0_g'], 'ln0b': bt['ln0_b'],
        'bqkv': jnp.concatenate([bt['bq'], bt['bk'], bt['bv']], axis=1),
        'bo': bt['bo'], 'ln1g': bt['ln1_g'], 'ln1b': bt['ln1_b'],
        'bf1': bt['bf1'], 'bf2': bt['bf2'], 'ln2g': bt['ln2_g'], 'ln2b': bt['ln2_b'],
        'bp': bt['bp'], 'bc': params['classifier_b'],
    }
    for i in range(1, V + 1):
        vec_vals[f'tok{i}'] = emb[i:i + 1]
    vec_slab = jnp.concatenate(
        [_pad2d(vec_vals[n].reshape(1, -1), 1, 128) for n in v_names], axis=0)
    vec_slab = _pad2d(vec_slab, _round_up(len(v_names), 8), 128)

    offs, out_used, out_total = _out_layout(view_dims, H, C)
    kernel = make_fused_kernel(B, view_dims, H, C, MH, FFN, w_off, v_idx,
                               out_used, out_total)

    out = pl.pallas_call(
        kernel,
        out_shape=jax.ShapeDtypeStruct((B, out_total), F32),
        in_specs=[_vmem_spec(), _vmem_spec(), _vmem_spec()],
        out_specs=_vmem_spec(),
        compiler_params=pltpu.CompilerParams(vmem_limit_bytes=32 * 1024 * 1024),
    )(xin, w_slab, vec_slab)

    feat = [out[:, offs[i]:offs[i] + H] for i in range(V)]
    xm = [out[:, offs[V + i]:offs[V + i] + view_dims[i]][:, None, :] for i in range(V)]
    xr = [out[:, offs[2 * V + i]:offs[2 * V + i] + view_dims[i]] for i in range(V)]
    logits = out[:, offs[3 * V]:offs[3 * V] + C]
    features = jnp.stack(feat, axis=1)                        # (B, V, H)
    return logits, xr, xm, features


def init_params(key, view_dims, hidden, class_num, mlp_hidden=48, ffn=64):
    keys = iter(jax.random.split(key, 64))

    def w(shape, scale=0.1):
        return scale * jax.random.normal(next(keys), shape, F32)

    def mlp(d_in, d_out):
        return {'w1': w((d_in, mlp_hidden)), 'b1': jnp.zeros((1, mlp_hidden), F32),
                'g1': jnp.ones((1, mlp_hidden), F32), 'be1': jnp.zeros((1, mlp_hidden), F32),
                'w2': w((mlp_hidden, d_out)), 'b2': jnp.zeros((1, d_out), F32),
                'g2': jnp.ones((1, d_out), F32), 'be2': jnp.zeros((1, d_out), F32)}

    V = len(view_dims)
    params = {
        'cls': jnp.zeros((1, 1, hidden), F32),                 # nn.Parameter(zeros)
        'projectors': [mlp(view_dims[i], hidden) for i in range(V)],
        'generators': [mlp(hidden, view_dims[i]) for i in range(V)],
        'bert': {
            'tok_emb': w((V + 1, hidden), 0.02), 'pos_emb': w((V + 1, hidden), 0.02),
            'ln0_g': jnp.ones((1, hidden), F32), 'ln0_b': jnp.zeros((1, hidden), F32),
            'wq': w((hidden, hidden)), 'bq': jnp.zeros((1, hidden), F32),
            'wk': w((hidden, hidden)), 'bk': jnp.zeros((1, hidden), F32),
            'wv': w((hidden, hidden)), 'bv': jnp.zeros((1, hidden), F32),
            'wo': w((hidden, hidden)), 'bo': jnp.zeros((1, hidden), F32),
            'ln1_g': jnp.ones((1, hidden), F32), 'ln1_b': jnp.zeros((1, hidden), F32),
            'wf1': w((hidden, ffn)), 'bf1': jnp.zeros((1, ffn), F32),
            'wf2': w((ffn, hidden)), 'bf2': jnp.zeros((1, hidden), F32),
            'ln2_g': jnp.ones((1, hidden), F32), 'ln2_b': jnp.zeros((1, hidden), F32),
            'wp': w((hidden, hidden)), 'bp': jnp.zeros((1, hidden), F32),
        },
        'classifier_w': w((hidden, class_num)),
        'classifier_b': jnp.zeros((1, class_num), F32),
    }
    return params


if __name__ == "__main__":
    key = jax.random.PRNGKey(0)
    B, V, H, C = 4, 2, 32, 3
    view_dims = [24, 16]
    k1, k2, kp = jax.random.split(key, 3)
    x_list = [jax.random.normal(k1, (B, view_dims[0]), F32),
              jax.random.normal(k2, (B, view_dims[1]), F32)]
    # view-presence mask (each sample has at least one view present)
    s = jnp.array([[1, 0], [0, 1], [1, 1], [1, 1]], dtype=jnp.int32)
    params = init_params(kp, view_dims, H, C)

    fwd = jax.jit(model_forward)
    logits, xr, xm, features = fwd(params, x_list, s)
    jax.block_until_ready((logits, xr, xm, features))

    assert logits.shape == (B, C)
    assert xr[0].shape == (B, view_dims[0]) and xr[1].shape == (B, view_dims[1])
    assert xm[0].shape == (B, 1, view_dims[0]) and xm[1].shape == (B, 1, view_dims[1])
    assert features.shape == (B, V, H)
    print("KERNEL_OK")
</pallas_src>

<mosaic_0001>
module attributes {stable_mosaic.version = 11 : i64} {
  func.func @kernel(%arg0: memref<4x82xf32, #tpu.memory_space<vmem>>, %arg1: memref<488x128xf32, #tpu.memory_space<vmem>>, %arg2: memref<32x128xf32, #tpu.memory_space<vmem>>, %arg3: memref<4x256xf32, #tpu.memory_space<vmem>>) attributes {dimension_semantics = [], scalar_prefetch = 0 : i64, scratch_operands = 0 : i64, tpu.core_type = #tpu.core_type<tc>} {
    %c0 = arith.constant 0 : index
    %c0_0 = arith.constant 0 : index
    %0 = vector.load %arg0[%c0, %c0_0] : memref<4x82xf32, #tpu.memory_space<vmem>>, vector<4x40xf32>
    %c0_1 = arith.constant 0 : index
    %c40 = arith.constant 40 : index
    %1 = vector.load %arg0[%c0_1, %c40] : memref<4x82xf32, #tpu.memory_space<vmem>>, vector<4x40xf32>
    %c0_2 = arith.constant 0 : index
    %c80 = arith.constant 80 : index
    %2 = vector.load %arg0[%c0_2, %c80] : memref<4x82xf32, #tpu.memory_space<vmem>>, vector<4x1xf32>
    %c0_3 = arith.constant 0 : index
    %c81 = arith.constant 81 : index
    %3 = vector.load %arg0[%c0_3, %c81] : memref<4x82xf32, #tpu.memory_space<vmem>>, vector<4x1xf32>
    %c0_4 = arith.constant 0 : index
    %c0_5 = arith.constant 0 : index
    %4 = vector.load %arg1[%c0_4, %c0_5] : memref<488x128xf32, #tpu.memory_space<vmem>>, vector<40x96xf32>
    %c40_6 = arith.constant 40 : index
    %c0_7 = arith.constant 0 : index
    %5 = vector.load %arg1[%c40_6, %c0_7] : memref<488x128xf32, #tpu.memory_space<vmem>>, vector<96x64xf32>
    %c136 = arith.constant 136 : index
    %c0_8 = arith.constant 0 : index
    %6 = vector.load %arg1[%c136, %c0_8] : memref<488x128xf32, #tpu.memory_space<vmem>>, vector<32x96xf32>
    %c168 = arith.constant 168 : index
    %c0_9 = arith.constant 0 : index
    %7 = vector.load %arg1[%c168, %c0_9] : memref<488x128xf32, #tpu.memory_space<vmem>>, vector<96x40xf32>
    %c264 = arith.constant 264 : index
    %c0_10 = arith.constant 0 : index
    %8 = vector.load %arg1[%c264, %c0_10] : memref<488x128xf32, #tpu.memory_space<vmem>>, vector<32x96xf32>
    %c296 = arith.constant 296 : index
    %c0_11 = arith.constant 0 : index
    %9 = vector.load %arg1[%c296, %c0_11] : memref<488x128xf32, #tpu.memory_space<vmem>>, vector<32x32xf32>
    %c328 = arith.constant 328 : index
    %c0_12 = arith.constant 0 : index
    %10 = vector.load %arg1[%c328, %c0_12] : memref<488x128xf32, #tpu.memory_space<vmem>>, vector<32x64xf32>
    %c360 = arith.constant 360 : index
    %c0_13 = arith.constant 0 : index
    %11 = vector.load %arg1[%c360, %c0_13] : memref<488x128xf32, #tpu.memory_space<vmem>>, vector<64x32xf32>
    %c424 = arith.constant 424 : index
    %c0_14 = arith.constant 0 : index
    %12 = vector.load %arg1[%c424, %c0_14] : memref<488x128xf32, #tpu.memory_space<vmem>>, vector<32x32xf32>
    %c456 = arith.constant 456 : index
    %c0_15 = arith.constant 0 : index
    %13 = vector.load %arg1[%c456, %c0_15] : memref<488x128xf32, #tpu.memory_space<vmem>>, vector<32x128xf32>
    %c0_16 = arith.constant 0 : index
    %c0_17 = arith.constant 0 : index
    %14 = vector.load %arg2[%c0_16, %c0_17] : memref<32x128xf32, #tpu.memory_space<vmem>>, vector<1x128xf32>
    %15 = vector.extract_strided_slice %14 {offsets = [0, 0], sizes = [1, 96], strides = [1, 1]} : vector<1x128xf32> to vector<1x96xf32>
    %c1 = arith.constant 1 : index
    %c0_18 = arith.constant 0 : index
    %16 = vector.load %arg2[%c1, %c0_18] : memref<32x128xf32, #tpu.memory_space<vmem>>, vector<1x128xf32>
    %17 = vector.extract_strided_slice %16 {offsets = [0, 0], sizes = [1, 96], strides = [1, 1]} : vector<1x128xf32> to vector<1x96xf32>
    %c2 = arith.constant 2 : index
    %c0_19 = arith.constant 0 : index
    %18 = vector.load %arg2[%c2, %c0_19] : memref<32x128xf32, #tpu.memory_space<vmem>>, vector<1x128xf32>
    %19 = vector.extract_strided_slice %18 {offsets = [0, 0], sizes = [1, 96], strides = [1, 1]} : vector<1x128xf32> to vector<1x96xf32>
    %c3 = arith.constant 3 : index
    %c0_20 = arith.constant 0 : index
    %20 = vector.load %arg2[%c3, %c0_20] : memref<32x128xf32, #tpu.memory_space<vmem>>, vector<1x128xf32>
    %21 = vector.extract_strided_slice %20 {offsets = [0, 0], sizes = [1, 64], strides = [1, 1]} : vector<1x128xf32> to vector<1x64xf32>
    %c4 = arith.constant 4 : index
    %c0_21 = arith.constant 0 : index
    %22 = vector.load %arg2[%c4, %c0_21] : memref<32x128xf32, #tpu.memory_space<vmem>>, vector<1x128xf32>
    %23 = vector.extract_strided_slice %22 {offsets = [0, 0], sizes = [1, 64], strides = [1, 1]} : vector<1x128xf32> to vector<1x64xf32>
    %c5 = arith.constant 5 : index
    %c0_22 = arith.constant 0 : index
    %24 = vector.load %arg2[%c5, %c0_22] : memref<32x128xf32, #tpu.memory_space<vmem>>, vector<1x128xf32>
    %25 = vector.extract_strided_slice %24 {offsets = [0, 0], sizes = [1, 64], strides = [1, 1]} : vector<1x128xf32> to vector<1x64xf32>
    %c6 = arith.constant 6 : index
    %c0_23 = arith.constant 0 : index
    %26 = vector.load %arg2[%c6, %c0_23] : memref<32x128xf32, #tpu.memory_space<vmem>>, vector<1x128xf32>
    %27 = vector.extract_strided_slice %26 {offsets = [0, 0], sizes = [1, 96], strides = [1, 1]} : vector<1x128xf32> to vector<1x96xf32>
    %c7 = arith.constant 7 : index
    %c0_24 = arith.constant 0 : index
    %28 = vector.load %arg2[%c7, %c0_24] : memref<32x128xf32, #tpu.memory_space<vmem>>, vector<1x128xf32>
    %29 = vector.extract_strided_slice %28 {offsets = [0, 0], sizes = [1, 96], strides = [1, 1]} : vector<1x128xf32> to vector<1x96xf32>
    %c8 = arith.constant 8 : index
    %c0_25 = arith.constant 0 : index
    %30 = vector.load %arg2[%c8, %c0_25] : memref<32x128xf32, #tpu.memory_space<vmem>>, vector<1x128xf32>
    %31 = vector.extract_strided_slice %30 {offsets = [0, 0], sizes = [1, 96], strides = [1, 1]} : vector<1x128xf32> to vector<1x96xf32>
    %c9 = arith.constant 9 : index
    %c0_26 = arith.constant 0 : index
    %32 = vector.load %arg2[%c9, %c0_26] : memref<32x128xf32, #tpu.memory_space<vmem>>, vector<1x128xf32>
    %33 = vector.extract_strided_slice %32 {offsets = [0, 0], sizes = [1, 40], strides = [1, 1]} : vector<1x128xf32> to vector<1x40xf32>
    %c10 = arith.constant 10 : index
    %c0_27 = arith.constant 0 : index
    %34 = vector.load %arg2[%c10, %c0_27] : memref<32x128xf32, #tpu.memory_space<vmem>>, vector<1x128xf32>
    %35 = vector.extract_strided_slice %34 {offsets = [0, 0], sizes = [1, 40], strides = [1, 1]} : vector<1x128xf32> to vector<1x40xf32>
    %c11 = arith.constant 11 : index
    %c0_28 = arith.constant 0 : index
    %36 = vector.load %arg2[%c11, %c0_28] : memref<32x128xf32, #tpu.memory_space<vmem>>, vector<1x128xf32>
    %37 = vector.extract_strided_slice %36 {offsets = [0, 0], sizes = [1, 40], strides = [1, 1]} : vector<1x128xf32> to vector<1x40xf32>
    %c12 = arith.constant 12 : index
    %c0_29 = arith.constant 0 : index
    %38 = vector.load %arg2[%c12, %c0_29] : memref<32x128xf32, #tpu.memory_space<vmem>>, vector<1x128xf32>
    %39 = vector.extract_strided_slice %38 {offsets = [0, 0], sizes = [1, 32], strides = [1, 1]} : vector<1x128xf32> to vector<1x32xf32>
    %c13 = arith.constant 13 : index
    %c0_30 = arith.constant 0 : index
    %40 = vector.load %arg2[%c13, %c0_30] : memref<32x128xf32, #tpu.memory_space<vmem>>, vector<1x128xf32>
    %41 = vector.extract_strided_slice %40 {offsets = [0, 0], sizes = [1, 32], strides = [1, 1]} : vector<1x128xf32> to vector<1x32xf32>
    %c14 = arith.constant 14 : index
    %c0_31 = arith.constant 0 : index
    %42 = vector.load %arg2[%c14, %c0_31] : memref<32x128xf32, #tpu.memory_space<vmem>>, vector<1x128xf32>
    %43 = vector.extract_strided_slice %42 {offsets = [0, 0], sizes = [1, 32], strides = [1, 1]} : vector<1x128xf32> to vector<1x32xf32>
    %c15 = arith.constant 15 : index
    %c0_32 = arith.constant 0 : index
    %44 = vector.load %arg2[%c15, %c0_32] : memref<32x128xf32, #tpu.memory_space<vmem>>, vector<1x128xf32>
    %45 = vector.extract_strided_slice %44 {offsets = [0, 0], sizes = [1, 32], strides = [1, 1]} : vector<1x128xf32> to vector<1x32xf32>
    %c16 = arith.constant 16 : index
    %c0_33 = arith.constant 0 : index
    %46 = vector.load %arg2[%c16, %c0_33] : memref<32x128xf32, #tpu.memory_space<vmem>>, vector<1x128xf32>
    %47 = vector.extract_strided_slice %46 {offsets = [0, 0], sizes = [1, 32], strides = [1, 1]} : vector<1x128xf32> to vector<1x32xf32>
    %c17 = arith.constant 17 : index
    %c0_34 = arith.constant 0 : index
    %48 = vector.load %arg2[%c17, %c0_34] : memref<32x128xf32, #tpu.memory_space<vmem>>, vector<1x128xf32>
    %49 = vector.extract_strided_slice %48 {offsets = [0, 0], sizes = [1, 96], strides = [1, 1]} : vector<1x128xf32> to vector<1x96xf32>
    %c18 = arith.constant 18 : index
    %c0_35 = arith.constant 0 : index
    %50 = vector.load %arg2[%c18, %c0_35] : memref<32x128xf32, #tpu.memory_space<vmem>>, vector<1x128xf32>
    %51 = vector.extract_strided_slice %50 {offsets = [0, 0], sizes = [1, 32], strides = [1, 1]} : vector<1x128xf32> to vector<1x32xf32>
    %c19 = arith.constant 19 : index
    %c0_36 = arith.constant 0 : index
    %52 = vector.load %arg2[%c19, %c0_36] : memref<32x128xf32, #tpu.memory_space<vmem>>, vector<1x128xf32>
    %53 = vector.extract_strided_slice %52 {offsets = [0, 0], sizes = [1, 32], strides = [1, 1]} : vector<1x128xf32> to vector<1x32xf32>
    %c20 = arith.constant 20 : index
    %c0_37 = arith.constant 0 : index
    %54 = vector.load %arg2[%c20, %c0_37] : memref<32x128xf32, #tpu.memory_space<vmem>>, vector<1x128xf32>
    %55 = vector.extract_strided_slice %54 {offsets = [0, 0], sizes = [1, 32], strides = [1, 1]} : vector<1x128xf32> to vector<1x32xf32>
    %c21 = arith.constant 21 : index
    %c0_38 = arith.constant 0 : index
    %56 = vector.load %arg2[%c21, %c0_38] : memref<32x128xf32, #tpu.memory_space<vmem>>, vector<1x128xf32>
    %57 = vector.extract_strided_slice %56 {offsets = [0, 0], sizes = [1, 64], strides = [1, 1]} : vector<1x128xf32> to vector<1x64xf32>
    %c22 = arith.constant 22 : index
    %c0_39 = arith.constant 0 : index
    %58 = vector.load %arg2[%c22, %c0_39] : memref<32x128xf32, #tpu.memory_space<vmem>>, vector<1x128xf32>
    %59 = vector.extract_strided_slice %58 {offsets = [0, 0], sizes = [1, 32], strides = [1, 1]} : vector<1x128xf32> to vector<1x32xf32>
    %c23 = arith.constant 23 : index
    %c0_40 = arith.constant 0 : index
    %60 = vector.load %arg2[%c23, %c0_40] : memref<32x128xf32, #tpu.memory_space<vmem>>, vector<1x128xf32>
    %61 = vector.extract_strided_slice %60 {offsets = [0, 0], sizes = [1, 32], strides = [1, 1]} : vector<1x128xf32> to vector<1x32xf32>
    %c24 = arith.constant 24 : index
    %c0_41 = arith.constant 0 : index
    %62 = vector.load %arg2[%c24, %c0_41] : memref<32x128xf32, #tpu.memory_space<vmem>>, vector<1x128xf32>
    %63 = vector.extract_strided_slice %62 {offsets = [0, 0], sizes = [1, 32], strides = [1, 1]} : vector<1x128xf32> to vector<1x32xf32>
    %c25 = arith.constant 25 : index
    %c0_42 = arith.constant 0 : index
    %64 = vector.load %arg2[%c25, %c0_42] : memref<32x128xf32, #tpu.memory_space<vmem>>, vector<1x128xf32>
    %65 = vector.extract_strided_slice %64 {offsets = [0, 0], sizes = [1, 32], strides = [1, 1]} : vector<1x128xf32> to vector<1x32xf32>
    %c26 = arith.constant 26 : index
    %c0_43 = arith.constant 0 : index
    %66 = vector.load %arg2[%c26, %c0_43] : memref<32x128xf32, #tpu.memory_space<vmem>>, vector<1x128xf32>
    %cst = arith.constant dense<0.000000e+00> : vector<4x96xf32>
    %67 = tpu.matmul %0, %4, %cst {dimension_numbers = #tpu.dot_dimension_numbers<[1], [0], [0], [1], [0, 0, 1, 1], [], []>} : vector<4x40xf32>, vector<40x96xf32>, vector<4x96xf32> -> vector<4x96xf32>
    %68 = vector.broadcast %15 : vector<1x96xf32> to vector<4x96xf32>
    %69 = arith.addf %67, %68 : vector<4x96xf32>
    %cst_44 = arith.constant dense<0.000000e+00> : vector<96xf32>
    %70 = vector.multi_reduction <add>, %69, %cst_44 [0] : vector<4x96xf32> to vector<96xf32>
    %71 = vector.shape_cast %70 : vector<96xf32> to vector<1x96xf32>
    %cst_45 = arith.constant 4.000000e+00 : f32
    %72 = vector.broadcast %cst_45 : f32 to vector<1x96xf32>
    %73 = arith.divf %71, %72 : vector<1x96xf32>
    %74 = vector.broadcast %73 : vector<1x96xf32> to vector<4x96xf32>
    %75 = arith.subf %69, %74 : vector<4x96xf32>
    %76 = arith.mulf %75, %75 : vector<4x96xf32>
    %cst_46 = arith.constant dense<0.000000e+00> : vector<96xf32>
    %77 = vector.multi_reduction <add>, %76, %cst_46 [0] : vector<4x96xf32> to vector<96xf32>
    %78 = vector.shape_cast %77 : vector<96xf32> to vector<1x96xf32>
    %cst_47 = arith.constant 4.000000e+00 : f32
    %79 = vector.broadcast %cst_47 : f32 to vector<1x96xf32>
    %80 = arith.divf %78, %79 : vector<1x96xf32>
    %81 = vector.broadcast %73 : vector<1x96xf32> to vector<4x96xf32>
    %82 = arith.subf %69, %81 : vector<4x96xf32>
    %cst_48 = arith.constant 9.99999974E-6 : f32
    %83 = vector.broadcast %cst_48 : f32 to vector<1x96xf32>
    %84 = arith.addf %80, %83 : vector<1x96xf32>
    %85 = math.rsqrt %84 : vector<1x96xf32>
    %86 = vector.broadcast %85 : vector<1x96xf32> to vector<4x96xf32>
    %87 = arith.mulf %82, %86 : vector<4x96xf32>
    %88 = vector.broadcast %17 : vector<1x96xf32> to vector<4x96xf32>
    %89 = arith.mulf %87, %88 : vector<4x96xf32>
    %90 = vector.broadcast %19 : vector<1x96xf32> to vector<4x96xf32>
    %91 = arith.addf %89, %90 : vector<4x96xf32>
    %cst_49 = arith.constant 0.000000e+00 : f32
    %92 = vector.broadcast %cst_49 : f32 to vector<4x96xf32>
    %93 = arith.cmpf ogt, %91, %92 : vector<4x96xf32>
    %cst_50 = arith.constant 2.000000e-01 : f32
    %94 = vector.broadcast %cst_50 : f32 to vector<4x96xf32>
    %95 = arith.mulf %94, %91 : vector<4x96xf32>
    %96 = arith.select %93, %91, %95 : vector<4x96xi1>, vector<4x96xf32>
    %cst_51 = arith.constant dense<0.000000e+00> : vector<4x64xf32>
    %97 = tpu.matmul %96, %5, %cst_51 {dimension_numbers = #tpu.dot_dimension_numbers<[1], [0], [0], [1], [0, 0, 1, 1], [], []>} : vector<4x96xf32>, vector<96x64xf32>, vector<4x64xf32> -> vector<4x64xf32>
    %98 = vector.broadcast %21 : vector<1x64xf32> to vector<4x64xf32>
    %99 = arith.addf %97, %98 : vector<4x64xf32>
    %cst_52 = arith.constant dense<0.000000e+00> : vector<64xf32>
    %100 = vector.multi_reduction <add>, %99, %cst_52 [0] : vector<4x64xf32> to vector<64xf32>
    %101 = vector.shape_cast %100 : vector<64xf32> to vector<1x64xf32>
    %cst_53 = arith.constant 4.000000e+00 : f32
    %102 = vector.broadcast %cst_53 : f32 to vector<1x64xf32>
    %103 = arith.divf %101, %102 : vector<1x64xf32>
    %104 = vector.broadcast %103 : vector<1x64xf32> to vector<4x64xf32>
    %105 = arith.subf %99, %104 : vector<4x64xf32>
    %106 = arith.mulf %105, %105 : vector<4x64xf32>
    %cst_54 = arith.constant dense<0.000000e+00> : vector<64xf32>
    %107 = vector.multi_reduction <add>, %106, %cst_54 [0] : vector<4x64xf32> to vector<64xf32>
    %108 = vector.shape_cast %107 : vector<64xf32> to vector<1x64xf32>
    %cst_55 = arith.constant 4.000000e+00 : f32
    %109 = vector.broadcast %cst_55 : f32 to vector<1x64xf32>
    %110 = arith.divf %108, %109 : vector<1x64xf32>
    %111 = vector.broadcast %103 : vector<1x64xf32> to vector<4x64xf32>
    %112 = arith.subf %99, %111 : vector<4x64xf32>
    %cst_56 = arith.constant 9.99999974E-6 : f32
    %113 = vector.broadcast %cst_56 : f32 to vector<1x64xf32>
    %114 = arith.addf %110, %113 : vector<1x64xf32>
    %115 = math.rsqrt %114 : vector<1x64xf32>
    %116 = vector.broadcast %115 : vector<1x64xf32> to vector<4x64xf32>
    %117 = arith.mulf %112, %116 : vector<4x64xf32>
    %118 = vector.broadcast %23 : vector<1x64xf32> to vector<4x64xf32>
    %119 = arith.mulf %117, %118 : vector<4x64xf32>
    %120 = vector.broadcast %25 : vector<1x64xf32> to vector<4x64xf32>
    %121 = arith.addf %119, %120 : vector<4x64xf32>
    %122 = vector.extract_strided_slice %121 {offsets = [0, 0], sizes = [4, 32], strides = [1, 1]} : vector<4x64xf32> to vector<4x32xf32>
    %123 = vector.broadcast %2 : vector<4x1xf32> to vector<4x32xf32>
    %124 = arith.mulf %122, %123 : vector<4x32xf32>
    %125 = vector.extract_strided_slice %121 {offsets = [0, 32], sizes = [4, 32], strides = [1, 1]} : vector<4x64xf32> to vector<4x32xf32>
    %126 = vector.broadcast %3 : vector<4x1xf32> to vector<4x32xf32>
    %127 = arith.mulf %125, %126 : vector<4x32xf32>
    %128 = arith.addf %124, %127 : vector<4x32xf32>
    %129 = arith.addf %2, %3 : vector<4x1xf32>
    %cst_57 = arith.constant 1.000000e+00 : f32
    %130 = vector.broadcast %cst_57 : f32 to vector<4x1xf32>
    %131 = arith.maximumf %129, %130 : vector<4x1xf32>
    %132 = tpu.reciprocal %131 {approx = true} : vector<4x1xf32> -> vector<4x1xf32>
    %133 = vector.broadcast %132 : vector<4x1xf32> to vector<4x32xf32>
    %134 = arith.mulf %128, %133 : vector<4x32xf32>
    %cst_58 = arith.constant dense<0.000000e+00> : vector<4x96xf32>
    %135 = tpu.matmul %134, %6, %cst_58 {dimension_numbers = #tpu.dot_dimension_numbers<[1], [0], [0], [1], [0, 0, 1, 1], [], []>} : vector<4x32xf32>, vector<32x96xf32>, vector<4x96xf32> -> vector<4x96xf32>
    %136 = vector.broadcast %27 : vector<1x96xf32> to vector<4x96xf32>
    %137 = arith.addf %135, %136 : vector<4x96xf32>
    %cst_59 = arith.constant dense<0.000000e+00> : vector<96xf32>
    %138 = vector.multi_reduction <add>, %137, %cst_59 [0] : vector<4x96xf32> to vector<96xf32>
    %139 = vector.shape_cast %138 : vector<96xf32> to vector<1x96xf32>
    %cst_60 = arith.constant 4.000000e+00 : f32
    %140 = vector.broadcast %cst_60 : f32 to vector<1x96xf32>
    %141 = arith.divf %139, %140 : vector<1x96xf32>
    %142 = vector.broadcast %141 : vector<1x96xf32> to vector<4x96xf32>
    %143 = arith.subf %137, %142 : vector<4x96xf32>
    %144 = arith.mulf %143, %143 : vector<4x96xf32>
    %cst_61 = arith.constant dense<0.000000e+00> : vector<96xf32>
    %145 = vector.multi_reduction <add>, %144, %cst_61 [0] : vector<4x96xf32> to vector<96xf32>
    %146 = vector.shape_cast %145 : vector<96xf32> to vector<1x96xf32>
    %cst_62 = arith.constant 4.000000e+00 : f32
    %147 = vector.broadcast %cst_62 : f32 to vector<1x96xf32>
    %148 = arith.divf %146, %147 : vector<1x96xf32>
    %149 = vector.broadcast %141 : vector<1x96xf32> to vector<4x96xf32>
    %150 = arith.subf %137, %149 : vector<4x96xf32>
    %cst_63 = arith.constant 9.99999974E-6 : f32
    %151 = vector.broadcast %cst_63 : f32 to vector<1x96xf32>
    %152 = arith.addf %148, %151 : vector<1x96xf32>
    %153 = math.rsqrt %152 : vector<1x96xf32>
    %154 = vector.broadcast %153 : vector<1x96xf32> to vector<4x96xf32>
    %155 = arith.mulf %150, %154 : vector<4x96xf32>
    %156 = vector.broadcast %29 : vector<1x96xf32> to vector<4x96xf32>
    %157 = arith.mulf %155, %156 : vector<4x96xf32>
    %158 = vector.broadcast %31 : vector<1x96xf32> to vector<4x96xf32>
    %159 = arith.addf %157, %158 : vector<4x96xf32>
    %cst_64 = arith.constant 0.000000e+00 : f32
    %160 = vector.broadcast %cst_64 : f32 to vector<4x96xf32>
    %161 = arith.cmpf ogt, %159, %160 : vector<4x96xf32>
    %cst_65 = arith.constant 2.000000e-01 : f32
    %162 = vector.broadcast %cst_65 : f32 to vector<4x96xf32>
    %163 = arith.mulf %162, %159 : vector<4x96xf32>
    %164 = arith.select %161, %159, %163 : vector<4x96xi1>, vector<4x96xf32>
    %cst_66 = arith.constant dense<0.000000e+00> : vector<4x40xf32>
    %165 = tpu.matmul %164, %7, %cst_66 {dimension_numbers = #tpu.dot_dimension_numbers<[1], [0], [0], [1], [0, 0, 1, 1], [], []>} : vector<4x96xf32>, vector<96x40xf32>, vector<4x40xf32> -> vector<4x40xf32>
    %166 = vector.broadcast %33 : vector<1x40xf32> to vector<4x40xf32>
    %167 = arith.addf %165, %166 : vector<4x40xf32>
    %cst_67 = arith.constant dense<0.000000e+00> : vector<40xf32>
    %168 = vector.multi_reduction <add>, %167, %cst_67 [0] : vector<4x40xf32> to vector<40xf32>
    %169 = vector.shape_cast %168 : vector<40xf32> to vector<1x40xf32>
    %cst_68 = arith.constant 4.000000e+00 : f32
    %170 = vector.broadcast %cst_68 : f32 to vector<1x40xf32>
    %171 = arith.divf %169, %170 : vector<1x40xf32>
    %172 = vector.broadcast %171 : vector<1x40xf32> to vector<4x40xf32>
    %173 = arith.subf %167, %172 : vector<4x40xf32>
    %174 = arith.mulf %173, %173 : vector<4x40xf32>
    %cst_69 = arith.constant dense<0.000000e+00> : vector<40xf32>
    %175 = vector.multi_reduction <add>, %174, %cst_69 [0] : vector<4x40xf32> to vector<40xf32>
    %176 = vector.shape_cast %175 : vector<40xf32> to vector<1x40xf32>
    %cst_70 = arith.constant 4.000000e+00 : f32
    %177 = vector.broadcast %cst_70 : f32 to vector<1x40xf32>
    %178 = arith.divf %176, %177 : vector<1x40xf32>
    %179 = vector.broadcast %171 : vector<1x40xf32> to vector<4x40xf32>
    %180 = arith.subf %167, %179 : vector<4x40xf32>
    %cst_71 = arith.constant 9.99999974E-6 : f32
    %181 = vector.broadcast %cst_71 : f32 to vector<1x40xf32>
    %182 = arith.addf %178, %181 : vector<1x40xf32>
    %183 = math.rsqrt %182 : vector<1x40xf32>
    %184 = vector.broadcast %183 : vector<1x40xf32> to vector<4x40xf32>
    %185 = arith.mulf %180, %184 : vector<4x40xf32>
    %186 = vector.broadcast %35 : vector<1x40xf32> to vector<4x40xf32>
    %187 = arith.mulf %185, %186 : vector<4x40xf32>
    %188 = vector.broadcast %37 : vector<1x40xf32> to vector<4x40xf32>
    %189 = arith.addf %187, %188 : vector<4x40xf32>
    %cst_72 = arith.constant 0.000000e+00 : f32
    %190 = vector.broadcast %cst_72 : f32 to vector<4x40xf32>
    %191 = arith.cmpf ogt, %1, %190 : vector<4x40xf32>
    %192 = arith.select %191, %0, %189 : vector<4x40xi1>, vector<4x40xf32>
    %193 = vector.extract_strided_slice %192 {offsets = [0, 0], sizes = [4, 24], strides = [1, 1]} : vector<4x40xf32> to vector<4x24xf32>
    %194 = arith.mulf %193, %193 : vector<4x24xf32>
    %cst_73 = arith.constant dense<0.000000e+00> : vector<4xf32>
    %195 = vector.multi_reduction <add>, %194, %cst_73 [1] : vector<4x24xf32> to vector<4xf32>
    %196 = vector.shape_cast %195 : vector<4xf32> to vector<4x1xf32>
    %cst_74 = arith.constant 1.000000e-24 : f32
    %197 = vector.broadcast %cst_74 : f32 to vector<4x1xf32>
    %198 = arith.maximumf %196, %197 : vector<4x1xf32>
    %199 = math.rsqrt %198 : vector<4x1xf32>
    %200 = vector.broadcast %199 : vector<4x1xf32> to vector<4x24xf32>
    %201 = arith.mulf %193, %200 : vector<4x24xf32>
    %202 = vector.extract_strided_slice %189 {offsets = [0, 0], sizes = [4, 24], strides = [1, 1]} : vector<4x40xf32> to vector<4x24xf32>
    %203 = vector.extract_strided_slice %192 {offsets = [0, 24], sizes = [4, 16], strides = [1, 1]} : vector<4x40xf32> to vector<4x16xf32>
    %204 = arith.mulf %203, %203 : vector<4x16xf32>
    %cst_75 = arith.constant dense<0.000000e+00> : vector<4xf32>
    %205 = vector.multi_reduction <add>, %204, %cst_75 [1] : vector<4x16xf32> to vector<4xf32>
    %206 = vector.shape_cast %205 : vector<4xf32> to vector<4x1xf32>
    %cst_76 = arith.constant 1.000000e-24 : f32
    %207 = vector.broadcast %cst_76 : f32 to vector<4x1xf32>
    %208 = arith.maximumf %206, %207 : vector<4x1xf32>
    %209 = math.rsqrt %208 : vector<4x1xf32>
    %210 = vector.broadcast %209 : vector<4x1xf32> to vector<4x16xf32>
    %211 = arith.mulf %203, %210 : vector<4x16xf32>
    %212 = vector.extract_strided_slice %189 {offsets = [0, 24], sizes = [4, 16], strides = [1, 1]} : vector<4x40xf32> to vector<4x16xf32>
    %cst_77 = arith.constant dense<0.000000e+00> : vector<4x96xf32>
    %213 = tpu.matmul %192, %4, %cst_77 {dimension_numbers = #tpu.dot_dimension_numbers<[1], [0], [0], [1], [0, 0, 1, 1], [], []>} : vector<4x40xf32>, vector<40x96xf32>, vector<4x96xf32> -> vector<4x96xf32>
    %214 = vector.broadcast %15 : vector<1x96xf32> to vector<4x96xf32>
    %215 = arith.addf %213, %214 : vector<4x96xf32>
    %cst_78 = arith.constant dense<0.000000e+00> : vector<96xf32>
    %216 = vector.multi_reduction <add>, %215, %cst_78 [0] : vector<4x96xf32> to vector<96xf32>
    %217 = vector.shape_cast %216 : vector<96xf32> to vector<1x96xf32>
    %cst_79 = arith.constant 4.000000e+00 : f32
    %218 = vector.broadcast %cst_79 : f32 to vector<1x96xf32>
    %219 = arith.divf %217, %218 : vector<1x96xf32>
    %220 = vector.broadcast %219 : vector<1x96xf32> to vector<4x96xf32>
    %221 = arith.subf %215, %220 : vector<4x96xf32>
    %222 = arith.mulf %221, %221 : vector<4x96xf32>
    %cst_80 = arith.constant dense<0.000000e+00> : vector<96xf32>
    %223 = vector.multi_reduction <add>, %222, %cst_80 [0] : vector<4x96xf32> to vector<96xf32>
    %224 = vector.shape_cast %223 : vector<96xf32> to vector<1x96xf32>
    %cst_81 = arith.constant 4.000000e+00 : f32
    %225 = vector.broadcast %cst_81 : f32 to vector<1x96xf32>
    %226 = arith.divf %224, %225 : vector<1x96xf32>
    %227 = vector.broadcast %219 : vector<1x96xf32> to vector<4x96xf32>
    %228 = arith.subf %215, %227 : vector<4x96xf32>
    %cst_82 = arith.constant 9.99999974E-6 : f32
    %229 = vector.broadcast %cst_82 : f32 to vector<1x96xf32>
    %230 = arith.addf %226, %229 : vector<1x96xf32>
    %231 = math.rsqrt %230 : vector<1x96xf32>
    %232 = vector.broadcast %231 : vector<1x96xf32> to vector<4x96xf32>
    %233 = arith.mulf %228, %232 : vector<4x96xf32>
    %234 = vector.broadcast %17 : vector<1x96xf32> to vector<4x96xf32>
    %235 = arith.mulf %233, %234 : vector<4x96xf32>
    %236 = vector.broadcast %19 : vector<1x96xf32> to vector<4x96xf32>
    %237 = arith.addf %235, %236 : vector<4x96xf32>
    %cst_83 = arith.constant 0.000000e+00 : f32
    %238 = vector.broadcast %cst_83 : f32 to vector<4x96xf32>
    %239 = arith.cmpf ogt, %237, %238 : vector<4x96xf32>
    %cst_84 = arith.constant 2.000000e-01 : f32
    %240 = vector.broadcast %cst_84 : f32 to vector<4x96xf32>
    %241 = arith.mulf %240, %237 : vector<4x96xf32>
    %242 = arith.select %239, %237, %241 : vector<4x96xi1>, vector<4x96xf32>
    %cst_85 = arith.constant dense<0.000000e+00> : vector<4x64xf32>
    %243 = tpu.matmul %242, %5, %cst_85 {dimension_numbers = #tpu.dot_dimension_numbers<[1], [0], [0], [1], [0, 0, 1, 1], [], []>} : vector<4x96xf32>, vector<96x64xf32>, vector<4x64xf32> -> vector<4x64xf32>
    %244 = vector.broadcast %21 : vector<1x64xf32> to vector<4x64xf32>
    %245 = arith.addf %243, %244 : vector<4x64xf32>
    %cst_86 = arith.constant dense<0.000000e+00> : vector<64xf32>
    %246 = vector.multi_reduction <add>, %245, %cst_86 [0] : vector<4x64xf32> to vector<64xf32>
    %247 = vector.shape_cast %246 : vector<64xf32> to vector<1x64xf32>
    %cst_87 = arith.constant 4.000000e+00 : f32
    %248 = vector.broadcast %cst_87 : f32 to vector<1x64xf32>
    %249 = arith.divf %247, %248 : vector<1x64xf32>
    %250 = vector.broadcast %249 : vector<1x64xf32> to vector<4x64xf32>
    %251 = arith.subf %245, %250 : vector<4x64xf32>
    %252 = arith.mulf %251, %251 : vector<4x64xf32>
    %cst_88 = arith.constant dense<0.000000e+00> : vector<64xf32>
    %253 = vector.multi_reduction <add>, %252, %cst_88 [0] : vector<4x64xf32> to vector<64xf32>
    %254 = vector.shape_cast %253 : vector<64xf32> to vector<1x64xf32>
    %cst_89 = arith.constant 4.000000e+00 : f32
    %255 = vector.broadcast %cst_89 : f32 to vector<1x64xf32>
    %256 = arith.divf %254, %255 : vector<1x64xf32>
    %257 = vector.broadcast %249 : vector<1x64xf32> to vector<4x64xf32>
    %258 = arith.subf %245, %257 : vector<4x64xf32>
    %cst_90 = arith.constant 9.99999974E-6 : f32
    %259 = vector.broadcast %cst_90 : f32 to vector<1x64xf32>
    %260 = arith.addf %256, %259 : vector<1x64xf32>
    %261 = math.rsqrt %260 : vector<1x64xf32>
    %262 = vector.broadcast %261 : vector<1x64xf32> to vector<4x64xf32>
    %263 = arith.mulf %258, %262 : vector<4x64xf32>
    %264 = vector.broadcast %23 : vector<1x64xf32> to vector<4x64xf32>
    %265 = arith.mulf %263, %264 : vector<4x64xf32>
    %266 = vector.broadcast %25 : vector<1x64xf32> to vector<4x64xf32>
    %267 = arith.addf %265, %266 : vector<4x64xf32>
    %268 = vector.extract_strided_slice %267 {offsets = [0, 0], sizes = [4, 32], strides = [1, 1]} : vector<4x64xf32> to vector<4x32xf32>
    %269 = arith.mulf %268, %268 : vector<4x32xf32>
    %cst_91 = arith.constant dense<0.000000e+00> : vector<4xf32>
    %270 = vector.multi_reduction <add>, %269, %cst_91 [1] : vector<4x32xf32> to vector<4xf32>
    %271 = vector.shape_cast %270 : vector<4xf32> to vector<4x1xf32>
    %cst_92 = arith.constant 1.000000e-24 : f32
    %272 = vector.broadcast %cst_92 : f32 to vector<4x1xf32>
    %273 = arith.maximumf %271, %272 : vector<4x1xf32>
    %274 = math.rsqrt %273 : vector<4x1xf32>
    %275 = vector.broadcast %274 : vector<4x1xf32> to vector<4x32xf32>
    %276 = arith.mulf %268, %275 : vector<4x32xf32>
    %277 = vector.extract_strided_slice %267 {offsets = [0, 32], sizes = [4, 32], strides = [1, 1]} : vector<4x64xf32> to vector<4x32xf32>
    %278 = arith.mulf %277, %277 : vector<4x32xf32>
    %cst_93 = arith.constant dense<0.000000e+00> : vector<4xf32>
    %279 = vector.multi_reduction <add>, %278, %cst_93 [1] : vector<4x32xf32> to vector<4xf32>
    %280 = vector.shape_cast %279 : vector<4xf32> to vector<4x1xf32>
    %cst_94 = arith.constant 1.000000e-24 : f32
    %281 = vector.broadcast %cst_94 : f32 to vector<4x1xf32>
    %282 = arith.maximumf %280, %281 : vector<4x1xf32>
    %283 = math.rsqrt %282 : vector<4x1xf32>
    %284 = vector.broadcast %283 : vector<4x1xf32> to vector<4x32xf32>
    %285 = arith.mulf %277, %284 : vector<4x32xf32>
    %286 = vector.shape_cast %39 : vector<1x32xf32> to vector<1x32xf32>
    %287 = vector.broadcast %286 : vector<1x32xf32> to vector<4x32xf32>
    %288 = vector.extract_strided_slice %267 {offsets = [0, 0], sizes = [4, 32], strides = [1, 1]} : vector<4x64xf32> to vector<4x32xf32>
    %289 = vector.broadcast %41 : vector<1x32xf32> to vector<4x32xf32>
    %290 = arith.addf %288, %289 : vector<4x32xf32>
    %291 = vector.extract_strided_slice %267 {offsets = [0, 32], sizes = [4, 32], strides = [1, 1]} : vector<4x64xf32> to vector<4x32xf32>
    %292 = vector.broadcast %43 : vector<1x32xf32> to vector<4x32xf32>
    %293 = arith.addf %291, %292 : vector<4x32xf32>
    %294 = tpu.concatenate %287, %290, %293 in 0 : vector<4x32xf32>, vector<4x32xf32>, vector<4x32xf32> -> vector<12x32xf32>
    %cst_95 = arith.constant dense<0.000000e+00> : vector<12xf32>
    %295 = vector.multi_reduction <add>, %294, %cst_95 [1] : vector<12x32xf32> to vector<12xf32>
    %296 = vector.shape_cast %295 : vector<12xf32> to vector<12x1xf32>
    %cst_96 = arith.constant 3.200000e+01 : f32
    %297 = vector.broadcast %cst_96 : f32 to vector<12x1xf32>
    %298 = arith.divf %296, %297 : vector<12x1xf32>
    %299 = vector.broadcast %298 : vector<12x1xf32> to vector<12x32xf32>
    %300 = arith.subf %294, %299 : vector<12x32xf32>
    %301 = arith.mulf %300, %300 : vector<12x32xf32>
    %cst_97 = arith.constant dense<0.000000e+00> : vector<12xf32>
    %302 = vector.multi_reduction <add>, %301, %cst_97 [1] : vector<12x32xf32> to vector<12xf32>
    %303 = vector.shape_cast %302 : vector<12xf32> to vector<12x1xf32>
    %cst_98 = arith.constant 3.200000e+01 : f32
    %304 = vector.broadcast %cst_98 : f32 to vector<12x1xf32>
    %305 = arith.divf %303, %304 : vector<12x1xf32>
    %306 = vector.broadcast %298 : vector<12x1xf32> to vector<12x32xf32>
    %307 = arith.subf %294, %306 : vector<12x32xf32>
    %cst_99 = arith.constant 9.99999996E-13 : f32
    %308 = vector.broadcast %cst_99 : f32 to vector<12x1xf32>
    %309 = arith.addf %305, %308 : vector<12x1xf32>
    %310 = math.rsqrt %309 : vector<12x1xf32>
    %311 = vector.broadcast %310 : vector<12x1xf32> to vector<12x32xf32>
    %312 = arith.mulf %307, %311 : vector<12x32xf32>
    %313 = vector.broadcast %45 : vector<1x32xf32> to vector<12x32xf32>
    %314 = arith.mulf %312, %313 : vector<12x32xf32>
    %315 = vector.broadcast %47 : vector<1x32xf32> to vector<12x32xf32>
    %316 = arith.addf %314, %315 : vector<12x32xf32>
    %cst_100 = arith.constant dense<0.000000e+00> : vector<12x96xf32>
    %317 = tpu.matmul %316, %8, %cst_100 {dimension_numbers = #tpu.dot_dimension_numbers<[1], [0], [0], [1], [0, 0, 1, 1], [], []>} : vector<12x32xf32>, vector<32x96xf32>, vector<12x96xf32> -> vector<12x96xf32>
    %318 = vector.broadcast %49 : vector<1x96xf32> to vector<12x96xf32>
    %319 = arith.addf %317, %318 : vector<12x96xf32>
    %320 = vector.extract_strided_slice %319 {offsets = [0, 0], sizes = [4, 32], strides = [1, 1]} : vector<12x96xf32> to vector<4x32xf32>
    %321 = vector.extract_strided_slice %319 {offsets = [0, 32], sizes = [4, 32], strides = [1, 1]} : vector<12x96xf32> to vector<4x32xf32>
    %322 = vector.extract_strided_slice %319 {offsets = [4, 32], sizes = [4, 32], strides = [1, 1]} : vector<12x96xf32> to vector<4x32xf32>
    %323 = vector.extract_strided_slice %319 {offsets = [8, 32], sizes = [4, 32], strides = [1, 1]} : vector<12x96xf32> to vector<4x32xf32>
    %324 = vector.extract_strided_slice %319 {offsets = [0, 64], sizes = [4, 32], strides = [1, 1]} : vector<12x96xf32> to vector<4x32xf32>
    %325 = vector.extract_strided_slice %319 {offsets = [4, 64], sizes = [4, 32], strides = [1, 1]} : vector<12x96xf32> to vector<4x32xf32>
    %326 = vector.extract_strided_slice %319 {offsets = [8, 64], sizes = [4, 32], strides = [1, 1]} : vector<12x96xf32> to vector<4x32xf32>
    %cst_101 = arith.constant 0.000000e+00 : f32
    %327 = vector.broadcast %cst_101 : f32 to vector<4x1xf32>
    %cst_102 = arith.constant 1.000000e+00 : f32
    %328 = vector.broadcast %cst_102 : f32 to vector<4x1xf32>
    %329 = arith.subf %328, %2 : vector<4x1xf32>
    %cst_103 = arith.constant -1.000000e+09 : f32
    %330 = vector.broadcast %cst_103 : f32 to vector<4x1xf32>
    %331 = arith.mulf %329, %330 : vector<4x1xf32>
    %cst_104 = arith.constant 1.000000e+00 : f32
    %332 = vector.broadcast %cst_104 : f32 to vector<4x1xf32>
    %333 = arith.subf %332, %3 : vector<4x1xf32>
    %cst_105 = arith.constant -1.000000e+09 : f32
    %334 = vector.broadcast %cst_105 : f32 to vector<4x1xf32>
    %335 = arith.mulf %333, %334 : vector<4x1xf32>
    %336 = arith.mulf %320, %321 : vector<4x32xf32>
    %cst_106 = arith.constant dense<0.000000e+00> : vector<4xf32>
    %337 = vector.multi_reduction <add>, %336, %cst_106 [1] : vector<4x32xf32> to vector<4xf32>
    %338 = vector.shape_cast %337 : vector<4xf32> to vector<4x1xf32>
    %cst_107 = arith.constant 0.176776692 : f32
    %339 = vector.broadcast %cst_107 : f32 to vector<4x1xf32>
    %340 = arith.mulf %338, %339 : vector<4x1xf32>
    %341 = arith.addf %340, %327 : vector<4x1xf32>
    %342 = arith.mulf %320, %322 : vector<4x32xf32>
    %cst_108 = arith.constant dense<0.000000e+00> : vector<4xf32>
    %343 = vector.multi_reduction <add>, %342, %cst_108 [1] : vector<4x32xf32> to vector<4xf32>
    %344 = vector.shape_cast %343 : vector<4xf32> to vector<4x1xf32>
    %cst_109 = arith.constant 0.176776692 : f32
    %345 = vector.broadcast %cst_109 : f32 to vector<4x1xf32>
    %346 = arith.mulf %344, %345 : vector<4x1xf32>
    %347 = arith.addf %346, %331 : vector<4x1xf32>
    %348 = arith.mulf %320, %323 : vector<4x32xf32>
    %cst_110 = arith.constant dense<0.000000e+00> : vector<4xf32>
    %349 = vector.multi_reduction <add>, %348, %cst_110 [1] : vector<4x32xf32> to vector<4xf32>
    %350 = vector.shape_cast %349 : vector<4xf32> to vector<4x1xf32>
    %cst_111 = arith.constant 0.176776692 : f32
    %351 = vector.broadcast %cst_111 : f32 to vector<4x1xf32>
    %352 = arith.mulf %350, %351 : vector<4x1xf32>
    %353 = arith.addf %352, %335 : vector<4x1xf32>
    %354 = arith.maximumf %341, %347 : vector<4x1xf32>
    %355 = arith.maximumf %354, %353 : vector<4x1xf32>
    %356 = arith.subf %341, %355 : vector<4x1xf32>
    %357 = math.exp %356 : vector<4x1xf32>
    %358 = arith.subf %347, %355 : vector<4x1xf32>
    %359 = math.exp %358 : vector<4x1xf32>
    %360 = arith.subf %353, %355 : vector<4x1xf32>
    %361 = math.exp %360 : vector<4x1xf32>
    %362 = vector.broadcast %357 : vector<4x1xf32> to vector<4x32xf32>
    %363 = arith.mulf %362, %324 : vector<4x32xf32>
    %364 = arith.addf %357, %359 : vector<4x1xf32>
    %365 = vector.broadcast %359 : vector<4x1xf32> to vector<4x32xf32>
    %366 = arith.mulf %365, %325 : vector<4x32xf32>
    %367 = arith.addf %363, %366 : vector<4x32xf32>
    %368 = arith.addf %364, %361 : vector<4x1xf32>
    %369 = vector.broadcast %361 : vector<4x1xf32> to vector<4x32xf32>
    %370 = arith.mulf %369, %326 : vector<4x32xf32>
    %371 = arith.addf %367, %370 : vector<4x32xf32>
    %372 = tpu.reciprocal %368 {approx = true} : vector<4x1xf32> -> vector<4x1xf32>
    %373 = vector.broadcast %372 : vector<4x1xf32> to vector<4x32xf32>
    %374 = arith.mulf %371, %373 : vector<4x32xf32>
    %cst_112 = arith.constant dense<0.000000e+00> : vector<4x32xf32>
    %375 = tpu.matmul %374, %9, %cst_112 {dimension_numbers = #tpu.dot_dimension_numbers<[1], [0], [0], [1], [0, 0, 1, 1], [], []>} : vector<4x32xf32>, vector<32x32xf32>, vector<4x32xf32> -> vector<4x32xf32>
    %376 = vector.broadcast %51 : vector<1x32xf32> to vector<4x32xf32>
    %377 = arith.addf %375, %376 : vector<4x32xf32>
    %378 = vector.extract_strided_slice %316 {offsets = [0, 0], sizes = [4, 32], strides = [1, 1]} : vector<12x32xf32> to vector<4x32xf32>
    %379 = arith.addf %378, %377 : vector<4x32xf32>
    %cst_113 = arith.constant dense<0.000000e+00> : vector<4xf32>
    %380 = vector.multi_reduction <add>, %379, %cst_113 [1] : vector<4x32xf32> to vector<4xf32>
    %381 = vector.shape_cast %380 : vector<4xf32> to vector<4x1xf32>
    %cst_114 = arith.constant 3.200000e+01 : f32
    %382 = vector.broadcast %cst_114 : f32 to vector<4x1xf32>
    %383 = arith.divf %381, %382 : vector<4x1xf32>
    %384 = vector.broadcast %383 : vector<4x1xf32> to vector<4x32xf32>
    %385 = arith.subf %379, %384 : vector<4x32xf32>
    %386 = arith.mulf %385, %385 : vector<4x32xf32>
    %cst_115 = arith.constant dense<0.000000e+00> : vector<4xf32>
    %387 = vector.multi_reduction <add>, %386, %cst_115 [1] : vector<4x32xf32> to vector<4xf32>
    %388 = vector.shape_cast %387 : vector<4xf32> to vector<4x1xf32>
    %cst_116 = arith.constant 3.200000e+01 : f32
    %389 = vector.broadcast %cst_116 : f32 to vector<4x1xf32>
    %390 = arith.divf %388, %389 : vector<4x1xf32>
    %391 = vector.broadcast %383 : vector<4x1xf32> to vector<4x32xf32>
    %392 = arith.subf %379, %391 : vector<4x32xf32>
    %cst_117 = arith.constant 9.99999996E-13 : f32
    %393 = vector.broadcast %cst_117 : f32 to vector<4x1xf32>
    %394 = arith.addf %390, %393 : vector<4x1xf32>
    %395 = math.rsqrt %394 : vector<4x1xf32>
    %396 = vector.broadcast %395 : vector<4x1xf32> to vector<4x32xf32>
    %397 = arith.mulf %392, %396 : vector<4x32xf32>
    %398 = vector.broadcast %53 : vector<1x32xf32> to vector<4x32xf32>
    %399 = arith.mulf %397, %398 : vector<4x32xf32>
    %400 = vector.broadcast %55 : vector<1x32xf32> to vector<4x32xf32>
    %401 = arith.addf %399, %400 : vector<4x32xf32>
    %cst_118 = arith.constant dense<0.000000e+00> : vector<4x64xf32>
    %402 = tpu.matmul %401, %10, %cst_118 {dimension_numbers = #tpu.dot_dimension_numbers<[1], [0], [0], [1], [0, 0, 1, 1], [], []>} : vector<4x32xf32>, vector<32x64xf32>, vector<4x64xf32> -> vector<4x64xf32>
    %403 = vector.broadcast %57 : vector<1x64xf32> to vector<4x64xf32>
    %404 = arith.addf %402, %403 : vector<4x64xf32>
    %cst_119 = arith.constant 5.000000e-01 : f32
    %405 = vector.broadcast %cst_119 : f32 to vector<4x64xf32>
    %406 = arith.mulf %405, %404 : vector<4x64xf32>
    %cst_120 = arith.constant 0.707106769 : f32
    %407 = vector.broadcast %cst_120 : f32 to vector<4x64xf32>
    %408 = arith.mulf %404, %407 : vector<4x64xf32>
    %409 = math.absf %408 : vector<4x64xf32>
    %cst_121 = arith.constant 0.327591091 : f32
    %410 = vector.broadcast %cst_121 : f32 to vector<4x64xf32>
    %411 = arith.mulf %410, %409 : vector<4x64xf32>
    %cst_122 = arith.constant 1.000000e+00 : f32
    %412 = vector.broadcast %cst_122 : f32 to vector<4x64xf32>
    %413 = arith.addf %412, %411 : vector<4x64xf32>
    %cst_123 = arith.constant 1.000000e+00 : f32
    %414 = vector.broadcast %cst_123 : f32 to vector<4x64xf32>
    %415 = arith.divf %414, %413 : vector<4x64xf32>
    %cst_124 = arith.constant 1.06140542 : f32
    %416 = vector.broadcast %cst_124 : f32 to vector<4x64xf32>
    %417 = arith.mulf %415, %416 : vector<4x64xf32>
    %cst_125 = arith.constant -1.45315206 : f32
    %418 = vector.broadcast %cst_125 : f32 to vector<4x64xf32>
    %419 = arith.addf %418, %417 : vector<4x64xf32>
    %420 = arith.mulf %415, %419 : vector<4x64xf32>
    %cst_126 = arith.constant 1.42141378 : f32
    %421 = vector.broadcast %cst_126 : f32 to vector<4x64xf32>
    %422 = arith.addf %421, %420 : vector<4x64xf32>
    %423 = arith.mulf %415, %422 : vector<4x64xf32>
    %cst_127 = arith.constant -0.284496725 : f32
    %424 = vector.broadcast %cst_127 : f32 to vector<4x64xf32>
    %425 = arith.addf %424, %423 : vector<4x64xf32>
    %426 = arith.mulf %415, %425 : vector<4x64xf32>
    %cst_128 = arith.constant 0.254829586 : f32
    %427 = vector.broadcast %cst_128 : f32 to vector<4x64xf32>
    %428 = arith.addf %427, %426 : vector<4x64xf32>
    %429 = arith.mulf %415, %428 : vector<4x64xf32>
    %cst_129 = arith.constant 0.000000e+00 : f32
    %430 = vector.broadcast %cst_129 : f32 to vector<4x64xf32>
    %431 = arith.subf %430, %409 : vector<4x64xf32>
    %432 = arith.mulf %431, %409 : vector<4x64xf32>
    %433 = math.exp %432 : vector<4x64xf32>
    %434 = arith.mulf %429, %433 : vector<4x64xf32>
    %cst_130 = arith.constant 1.000000e+00 : f32
    %435 = vector.broadcast %cst_130 : f32 to vector<4x64xf32>
    %436 = arith.subf %435, %434 : vector<4x64xf32>
    %cst_131 = arith.constant 0.000000e+00 : f32
    %437 = vector.broadcast %cst_131 : f32 to vector<4x64xf32>
    %438 = arith.cmpf oge, %408, %437 : vector<4x64xf32>
    %cst_132 = arith.constant 0.000000e+00 : f32
    %439 = vector.broadcast %cst_132 : f32 to vector<4x64xf32>
    %440 = arith.subf %439, %436 : vector<4x64xf32>
    %441 = arith.select %438, %436, %440 : vector<4x64xi1>, vector<4x64xf32>
    %cst_133 = arith.constant 1.000000e+00 : f32
    %442 = vector.broadcast %cst_133 : f32 to vector<4x64xf32>
    %443 = arith.addf %442, %441 : vector<4x64xf32>
    %444 = arith.mulf %406, %443 : vector<4x64xf32>
    %cst_134 = arith.constant dense<0.000000e+00> : vector<4x32xf32>
    %445 = tpu.matmul %444, %11, %cst_134 {dimension_numbers = #tpu.dot_dimension_numbers<[1], [0], [0], [1], [0, 0, 1, 1], [], []>} : vector<4x64xf32>, vector<64x32xf32>, vector<4x32xf32> -> vector<4x32xf32>
    %446 = vector.broadcast %59 : vector<1x32xf32> to vector<4x32xf32>
    %447 = arith.addf %445, %446 : vector<4x32xf32>
    %448 = arith.addf %401, %447 : vector<4x32xf32>
    %cst_135 = arith.constant dense<0.000000e+00> : vector<4xf32>
    %449 = vector.multi_reduction <add>, %448, %cst_135 [1] : vector<4x32xf32> to vector<4xf32>
    %450 = vector.shape_cast %449 : vector<4xf32> to vector<4x1xf32>
    %cst_136 = arith.constant 3.200000e+01 : f32
    %451 = vector.broadcast %cst_136 : f32 to vector<4x1xf32>
    %452 = arith.divf %450, %451 : vector<4x1xf32>
    %453 = vector.broadcast %452 : vector<4x1xf32> to vector<4x32xf32>
    %454 = arith.subf %448, %453 : vector<4x32xf32>
    %455 = arith.mulf %454, %454 : vector<4x32xf32>
    %cst_137 = arith.constant dense<0.000000e+00> : vector<4xf32>
    %456 = vector.multi_reduction <add>, %455, %cst_137 [1] : vector<4x32xf32> to vector<4xf32>
    %457 = vector.shape_cast %456 : vector<4xf32> to vector<4x1xf32>
    %cst_138 = arith.constant 3.200000e+01 : f32
    %458 = vector.broadcast %cst_138 : f32 to vector<4x1xf32>
    %459 = arith.divf %457, %458 : vector<4x1xf32>
    %460 = vector.broadcast %452 : vector<4x1xf32> to vector<4x32xf32>
    %461 = arith.subf %448, %460 : vector<4x32xf32>
    %cst_139 = arith.constant 9.99999996E-13 : f32
    %462 = vector.broadcast %cst_139 : f32 to vector<4x1xf32>
    %463 = arith.addf %459, %462 : vector<4x1xf32>
    %464 = math.rsqrt %463 : vector<4x1xf32>
    %465 = vector.broadcast %464 : vector<4x1xf32> to vector<4x32xf32>
    %466 = arith.mulf %461, %465 : vector<4x32xf32>
    %467 = vector.broadcast %61 : vector<1x32xf32> to vector<4x32xf32>
    %468 = arith.mulf %466, %467 : vector<4x32xf32>
    %469 = vector.broadcast %63 : vector<1x32xf32> to vector<4x32xf32>
    %470 = arith.addf %468, %469 : vector<4x32xf32>
    %cst_140 = arith.constant dense<0.000000e+00> : vector<4x32xf32>
    %471 = tpu.matmul %470, %12, %cst_140 {dimension_numbers = #tpu.dot_dimension_numbers<[1], [0], [0], [1], [0, 0, 1, 1], [], []>} : vector<4x32xf32>, vector<32x32xf32>, vector<4x32xf32> -> vector<4x32xf32>
    %472 = vector.broadcast %65 : vector<1x32xf32> to vector<4x32xf32>
    %473 = arith.addf %471, %472 : vector<4x32xf32>
    %474 = math.tanh %473 : vector<4x32xf32>
    %cst_141 = arith.constant dense<0.000000e+00> : vector<4x128xf32>
    %475 = tpu.matmul %474, %13, %cst_141 {dimension_numbers = #tpu.dot_dimension_numbers<[1], [0], [0], [1], [0, 0, 1, 1], [], []>} : vector<4x32xf32>, vector<32x128xf32>, vector<4x128xf32> -> vector<4x128xf32>
    %476 = vector.broadcast %66 : vector<1x128xf32> to vector<4x128xf32>
    %477 = arith.addf %475, %476 : vector<4x128xf32>
    %478 = vector.extract_strided_slice %477 {offsets = [0, 0], sizes = [4, 3], strides = [1, 1]} : vector<4x128xf32> to vector<4x3xf32>
    %cst_142 = arith.constant 0.000000e+00 : f32
    %479 = vector.broadcast %cst_142 : f32 to vector<4x109xf32>
    %480 = tpu.concatenate %276, %285, %201, %211, %202, %212, %478, %479 in 1 : vector<4x32xf32>, vector<4x32xf32>, vector<4x24xf32>, vector<4x16xf32>, vector<4x24xf32>, vector<4x16xf32>, vector<4x3xf32>, vector<4x109xf32> -> vector<4x256xf32>
    %c0_143 = arith.constant 0 : index
    %c0_144 = arith.constant 0 : index
    %481 = vector.load %arg3[%c0_143, %c0_144] : memref<4x256xf32, #tpu.memory_space<vmem>>, vector<4x256xf32>
    tpu.vector_store %arg3[%c0_143, %c0_144], %480 {strides = array<i32>} : memref<4x256xf32, #tpu.memory_space<vmem>>, vector<4x256xf32>,
    return
  }
}

</mosaic_0001>

<llo_original>
// kernel: model_forward.1
$region0: #{model_forward.1}
  #allocation0 [shape = 'u32[]', space=smem, size = 0x4, offset = 0x4, fixed_abs, tag = 'smem constant byte address 0x4 - core index']
  #allocation1 [shape = 'u32[144,128]{1,0:T(1,128)}', space=vmem, size = 0x12000, scoped, tag = 'internal scratch']
  %s0 = inlined_call_operand.vmem [shape: f32[4,82], index: 0, kind: input, shape index: {}]
  %s1 = inlined_call_operand.vmem [shape: f32[488,128], index: 1, kind: input, shape index: {}]
  %s2 = inlined_call_operand.vmem [shape: f32[32,128], index: 2, kind: input, shape index: {}]
  %s3 = inlined_call_operand.vmem [shape: f32[4,256], index: 3, kind: output, shape index: {}]
  %s4 = sld [smem:[#allocation0]]
  $region22: #{model_forward.1} parent=0
    _
  %s6 = ssub.s32 1, %s4
  %s7 = scalar_select 0, %s6, %s4
  // Predicated region
  $region2: #{model_forward.1} parent=0 // pred_check
    _
  $region3: #{model_forward.1} parent=0 // pred_check_branch
    %9 = sbr.rel (0) target = $region5
  $region4: #{model_forward.1} parent=0 // pred_region
    _
  $region5: #{model_forward.1} parent=0 // pred_fallthru
    _
  // Predicated region
  $region6: #{model_forward.1} parent=0 // pred_check
    _
  $region7: #{model_forward.1} parent=0 // pred_check_branch
    %11 = sbr.rel (0) target = $region9
  $region8: #{model_forward.1} parent=0 // pred_region
    _
  $region9: #{model_forward.1} parent=0 // pred_fallthru
    _
  // Predicated region
  $region10: #{model_forward.1} parent=0 // pred_check
    _
  $region11: #{model_forward.1} parent=0 // pred_check_branch
    %13 = sbr.rel (0) target = $region13
  $region12: #{model_forward.1} parent=0 // pred_region
    _
  $region13: #{model_forward.1} parent=0 // pred_fallthru
    _
  %v14 = vld [vmem:[%s0] sm:$0xf]
  %v15 = vld [vmem:[%s1] sm:$0xff]
  %v16 = vld [vmem:[%s1 + $0x8] sm:$0xff]
  %v17 = vld [vmem:[%s1 + $0x10] sm:$0xff]
  %v18 = vld [vmem:[%s1 + $0x18] sm:$0xff]
  %v19 = vld [vmem:[%s1 + $0x20] sm:$0xff]
  %v20 = vld [vmem:[%s1 + $0x28] sm:$0xff]
  %v21 = vld [vmem:[%s1 + $0x30] sm:$0xff]
  %v22 = vld [vmem:[%s1 + $0x38] sm:$0xff]
  %v23 = vld [vmem:[%s1 + $0x40] sm:$0xff]
  %v24 = vld [vmem:[%s1 + $0x48] sm:$0xff]
  %v25 = vld [vmem:[%s1 + $0x50] sm:$0xff]
  %v26 = vld [vmem:[%s1 + $0x58] sm:$0xff]
  %v27 = vld [vmem:[%s1 + $0x60] sm:$0xff]
  %v28 = vld [vmem:[%s1 + $0x68] sm:$0xff]
  %v29 = vld [vmem:[%s1 + $0x70] sm:$0xff]
  %v30 = vld [vmem:[%s1 + $0x78] sm:$0xff]
  %v31 = vld [vmem:[%s1 + $0x80] sm:$0xff]
  %v32 = vld [vmem:[%s1 + $0x88] sm:$0xff]
  %v33 = vld [vmem:[%s1 + $0x90] sm:$0xff]
  %v34 = vld [vmem:[%s1 + $0x98] sm:$0xff]
  %v35 = vld [vmem:[%s1 + $0xa0] sm:$0xff]
  %v36 = vld [vmem:[%s1 + $0xa8] sm:$0xff]
  %v37 = vld [vmem:[%s1 + $0xb0] sm:$0xff]
  %v38 = vld [vmem:[%s1 + $0xb8] sm:$0xff]
  %v39 = vld [vmem:[%s1 + $0xc0] sm:$0xff]
  %v40 = vld [vmem:[%s1 + $0xc8] sm:$0xff]
  %v41 = vld [vmem:[%s1 + $0xd0] sm:$0xff]
  %v42 = vld [vmem:[%s1 + $0xd8] sm:$0xff]
  %v43 = vld [vmem:[%s1 + $0xe0] sm:$0xff]
  %v44 = vld [vmem:[%s1 + $0xe8] sm:$0xff]
  %v45 = vld [vmem:[%s1 + $0xf0] sm:$0xff]
  %v46 = vld [vmem:[%s1 + $0xf8] sm:$0xff]
  %v47 = vld [vmem:[%s1 + $0x100] sm:$0xff]
  %v48 = vld [vmem:[%s1 + $0x108] sm:$0xff]
  %v49 = vld [vmem:[%s1 + $0x110] sm:$0xff]
  %v50 = vld [vmem:[%s1 + $0x118] sm:$0xff]
  %v51 = vld [vmem:[%s1 + $0x120] sm:$0xff]
  %v52 = vld [vmem:[%s1 + $0x128] sm:$0xff]
  %v53 = vld [vmem:[%s1 + $0x130] sm:$0xff]
  %v54 = vld [vmem:[%s1 + $0x138] sm:$0xff]
  %v55 = vld [vmem:[%s1 + $0x140] sm:$0xff]
  %v56 = vld [vmem:[%s1 + $0x148] sm:$0xff]
  %v57 = vld [vmem:[%s1 + $0x150] sm:$0xff]
  %v58 = vld [vmem:[%s1 + $0x158] sm:$0xff]
  %v59 = vld [vmem:[%s1 + $0x160] sm:$0xff]
  %v60 = vld [vmem:[%s1 + $0x168] sm:$0xff]
  %v61 = vld [vmem:[%s1 + $0x170] sm:$0xff]
  %v62 = vld [vmem:[%s1 + $0x178] sm:$0xff]
  %v63 = vld [vmem:[%s1 + $0x180] sm:$0xff]
  %v64 = vld [vmem:[%s1 + $0x188] sm:$0xff]
  %v65 = vld [vmem:[%s1 + $0x190] sm:$0xff]
  %v66 = vld [vmem:[%s1 + $0x198] sm:$0xff]
  %v67 = vld [vmem:[%s1 + $0x1a0] sm:$0xff]
  %v68 = vld [vmem:[%s1 + $0x1a8] sm:$0xff]
  %v69 = vld [vmem:[%s1 + $0x1b0] sm:$0xff]
  %v70 = vld [vmem:[%s1 + $0x1b8] sm:$0xff]
  %v71 = vld [vmem:[%s1 + $0x1c0] sm:$0xff]
  %v72 = vld [vmem:[%s1 + $0x1c8] sm:$0xff]
  %v73 = vld [vmem:[%s1 + $0x1d0] sm:$0xff]
  %v74 = vld [vmem:[%s1 + $0x1d8] sm:$0xff]
  %v75 = vld [vmem:[%s1 + $0x1e0] sm:$0xff]
  %v76 = vld [vmem:[%s2] sm:$0x1]
  %v77 = vld [vmem:[%s2 + $0x1] sm:$0x1]
  %v78 = vld [vmem:[%s2 + $0x2] sm:$0x1]
  %v79 = vld [vmem:[%s2 + $0x3] sm:$0x1]
  %v80 = vld [vmem:[%s2 + $0x4] sm:$0x1]
  %v81 = vld [vmem:[%s2 + $0x5] sm:$0x1]
  %v82 = vld [vmem:[%s2 + $0x6] sm:$0x1]
  %v83 = vld [vmem:[%s2 + $0x7] sm:$0x1]
  %v84 = vld [vmem:[%s2 + $0x8] sm:$0x1]
  %v85 = vld [vmem:[%s2 + $0x9] sm:$0x1]
  %v86 = vld [vmem:[%s2 + $0xa] sm:$0x1]
  %v87 = vld [vmem:[%s2 + $0xb] sm:$0x1]
  %v88 = vld [vmem:[%s2 + $0xc] sm:$0x1]
  %v89 = vld [vmem:[%s2 + $0xd] sm:$0x1]
  %v90 = vld [vmem:[%s2 + $0xe] sm:$0x1]
  %v91 = vld [vmem:[%s2 + $0xf] sm:$0x1]
  %v92 = vld [vmem:[%s2 + $0x10] sm:$0x1]
  %v93 = vld [vmem:[%s2 + $0x11] sm:$0x1]
  %v94 = vld [vmem:[%s2 + $0x12] sm:$0x1]
  %v95 = vld [vmem:[%s2 + $0x13] sm:$0x1]
  %v96 = vld [vmem:[%s2 + $0x14] sm:$0x1]
  %v97 = vld [vmem:[%s2 + $0x15] sm:$0x1]
  %v98 = vld [vmem:[%s2 + $0x16] sm:$0x1]
  %v99 = vld [vmem:[%s2 + $0x17] sm:$0x1]
  %v100 = vld [vmem:[%s2 + $0x18] sm:$0x1]
  %v101 = vld [vmem:[%s2 + $0x19] sm:$0x1]
  %v102 = vld [vmem:[%s2 + $0x1a] sm:$0x1]
  %v103 = vlaneseq
  %v104 = vshrl.u32 %v103, 7
  %v105 = vsub.s32 0, %v104
  %v106 = vrot.slane %v76, %v105
  %vm107 = vcmask 326656
  %v109 = vsel %vm107, %v14, 0
  %111 = vmatprep.subr.mxu0 0.0
  %112 = vmatpush1.msra.mxu0 %v15
  %113 = vmatprep.subr.mxu0 0.0
  %114 = vmatpush1.msra.mxu0 %v16
  %115 = vmatprep.subr.mxu0 0.0
  %116 = vmatpush1.msra.mxu0 %v17
  %117 = vmatprep.subr.mxu0 0.0
  %118 = vmatpush1.msra.mxu0 %v18
  %119 = vmatprep.subr.mxu0 0.0
  %120 = vmatpush1.msra.mxu0 %v19
  %121 = vmatprep.subr.mxu0 0.0
  %122 = vmatpush1.msra.mxu0 0.0
  %123 = vmatprep.subr.mxu0 0.0
  %124 = vmatpush1.msra.mxu0 0.0
  %125 = vmatprep.subr.mxu0 0.0
  %126 = vmatpush1.msra.mxu0 0.0
  %127 = vmatprep.subr.mxu0 0.0
  %128 = vmatpush1.msra.mxu0 0.0
  %129 = vmatprep.subr.mxu0 0.0
  %130 = vmatpush1.msra.mxu0 0.0
  %131 = vmatprep.subr.mxu0 0.0
  %132 = vmatpush1.msra.mxu0 0.0
  %133 = vmatprep.subr.mxu0 0.0
  %134 = vmatpush1.msra.mxu0 0.0
  %135 = vmatprep.subr.mxu0 0.0
  %136 = vmatpush1.msra.mxu0 0.0
  %137 = vmatprep.subr.mxu0 0.0
  %138 = vmatpush1.msra.mxu0 0.0
  %139 = vmatprep.subr.mxu0 0.0
  %140 = vmatpush1.msra.mxu0 0.0
  %141 = vmatprep.subr.mxu0 0.0
  %142 = vmatpush1.msra.mxu0 0.0
  %143 = vmatprep.subr.mxu0 0.0
  %144 = vmatpush1.msra.mxu0 0.0
  %145 = vmatprep.subr.mxu0 0.0
  %146 = vmatpush1.msra.mxu0 0.0
  %147 = vmatprep.subr.mxu0 0.0
  %148 = vmatpush1.msra.mxu0 0.0
  %149 = vmatprep.subr.mxu0 0.0
  %150 = vmatpush1.msra.mxu0 0.0
  %151 = vmatprep.subr.mxu0 0.0
  %152 = vmatpush1.msra.mxu0 0.0
  %153 = vmatprep.subr.mxu0 0.0
  %154 = vmatpush1.msra.mxu0 0.0
  %155 = vmatprep.subr.mxu0 0.0
  %156 = vmatpush1.msra.mxu0 0.0
  %157 = vmatprep.subr.mxu0 0.0
  %158 = vmatpush1.msra.mxu0 0.0
  %159 = vmatprep.subr.mxu0 0.0
  %160 = vmatpush1.msra.mxu0 0.0
  %161 = vmatprep.subr.mxu0 0.0
  %162 = vmatpush1.msra.mxu0 0.0
  %163 = vmatprep.subr.mxu0 0.0
  %164 = vmatpush1.msra.mxu0 0.0
  %165 = vmatprep.subr.mxu0 0.0
  %166 = vmatpush1.msra.mxu0 0.0
  %167 = vmatprep.subr.mxu0 0.0
  %168 = vmatpush1.msra.mxu0 0.0
  %169 = vmatprep.subr.mxu0 0.0
  %170 = vmatpush1.msra.mxu0 0.0
  %171 = vmatprep.subr.mxu0 0.0
  %172 = vmatpush1.msra.mxu0 0.0
  %173 = vmatprep.subr.mxu0 0.0
  %174 = vmatpush1.msra.mxu0 0.0
  %175 = vmatprep.mubr.f32.mxu0 0.0
  %176 = vmatmul.mubr.f32.gmra.mrb[0].mxu0 %v109
  %v177 = vpop.f32.mrb[0].mxu0
  %v178 = vadd.f32 %v106, %v177
  %v179 = vpop.f32.mrb[0].mxu0
  %180 = vdwg.mxu0
  %vm181 = vcmask 781312
  %v182 = vsel %vm181, %v178, 0.0
  %v183 = vrot.slane %v182, 4
  %v184 = vadd.f32 %v182, %v183
  %v185 = vrot.slane %v184, 2
  %v186 = vadd.f32 %v184, %v185
  %v187 = vrot.slane %v186, 1
  %v188 = vadd.f32 %v186, %v187
  %v189 = vrcp.pop 4.0
  %v190 = vmul.f32 %v188, %v189
  %v191 = vsub.f32 %v178, %v190
  %v192 = vmul.f32 %v191, %v191
  %v193 = vsel %vm181, %v192, 0.0
  %v194 = vrot.slane %v193, 4
  %v195 = vadd.f32 %v193, %v194
  %v196 = vrot.slane %v195, 2
  %v197 = vadd.f32 %v195, %v196
  %v198 = vrot.slane %v197, 1
  %v199 = vadd.f32 %v197, %v198
  %v200 = vmul.f32 %v199, %v189
  %v201 = vadd.f32 %v200, 1e-05
  %v202 = vrsqrt.pop %v201
  %v203 = vmul.f32 %v191, %v202
  %v204 = vlaneseq
  %v205 = vshrl.u32 %v204, 7
  %v206 = vsub.s32 0, %v205
  %v207 = vrot.slane %v77, %v206
  %v208 = vmul.f32 %v203, %v207
  %v209 = vlaneseq
  %v210 = vshrl.u32 %v209, 7
  %v211 = vsub.s32 0, %v210
  %v212 = vrot.slane %v78, %v211
  %v213 = vadd.f32 %v208, %v212
  %vm214 = vcmp.gt.f32.partialorder %v213, 0.0
  %v215 = vmul.f32 %v213, 0.2
  %v216 = vsel %vm214, %v213, %v215
  %v217 = vlaneseq
  %v218 = vshrl.u32 %v217, 7
  %v219 = vsub.s32 0, %v218
  %v220 = vrot.slane %v79, %v219
  %vm221 = vcmask 785408
  %v223 = vsel %vm221, %v216, 0
  %225 = vmatprep.subr.mxu0 0.0
  %226 = vmatpush1.msra.mxu0 %v20
  %227 = vmatprep.subr.mxu0 0.0
  %228 = vmatpush1.msra.mxu0 %v21
  %229 = vmatprep.subr.mxu0 0.0
  %230 = vmatpush1.msra.mxu0 %v22
  %231 = vmatprep.subr.mxu0 0.0
  %232 = vmatpush1.msra.mxu0 %v23
  %233 = vmatprep.subr.mxu0 0.0
  %234 = vmatpush1.msra.mxu0 %v24
  %235 = vmatprep.subr.mxu0 0.0
  %236 = vmatpush1.msra.mxu0 %v25
  %237 = vmatprep.subr.mxu0 0.0
  %238 = vmatpush1.msra.mxu0 %v26
  %239 = vmatprep.subr.mxu0 0.0
  %240 = vmatpush1.msra.mxu0 %v27
  %241 = vmatprep.subr.mxu0 0.0
  %242 = vmatpush1.msra.mxu0 %v28
  %243 = vmatprep.subr.mxu0 0.0
  %244 = vmatpush1.msra.mxu0 %v29
  %245 = vmatprep.subr.mxu0 0.0
  %246 = vmatpush1.msra.mxu0 %v30
  %247 = vmatprep.subr.mxu0 0.0
  %248 = vmatpush1.msra.mxu0 %v31
  %249 = vmatprep.subr.mxu0 0.0
  %250 = vmatpush1.msra.mxu0 0.0
  %251 = vmatprep.subr.mxu0 0.0
  %252 = vmatpush1.msra.mxu0 0.0
  %253 = vmatprep.subr.mxu0 0.0
  %254 = vmatpush1.msra.mxu0 0.0
  %255 = vmatprep.subr.mxu0 0.0
  %256 = vmatpush1.msra.mxu0 0.0
  %257 = vmatprep.subr.mxu0 0.0
  %258 = vmatpush1.msra.mxu0 0.0
  %259 = vmatprep.subr.mxu0 0.0
  %260 = vmatpush1.msra.mxu0 0.0
  %261 = vmatprep.subr.mxu0 0.0
  %262 = vmatpush1.msra.mxu0 0.0
  %263 = vmatprep.subr.mxu0 0.0
  %264 = vmatpush1.msra.mxu0 0.0
  %265 = vmatprep.subr.mxu0 0.0
  %266 = vmatpush1.msra.mxu0 0.0
  %267 = vmatprep.subr.mxu0 0.0
  %268 = vmatpush1.msra.mxu0 0.0
  %269 = vmatprep.subr.mxu0 0.0
  %270 = vmatpush1.msra.mxu0 0.0
  %271 = vmatprep.subr.mxu0 0.0
  %272 = vmatpush1.msra.mxu0 0.0
  %273 = vmatprep.subr.mxu0 0.0
  %274 = vmatpush1.msra.mxu0 0.0
  %275 = vmatprep.subr.mxu0 0.0
  %276 = vmatpush1.msra.mxu0 0.0
  %277 = vmatprep.subr.mxu0 0.0
  %278 = vmatpush1.msra.mxu0 0.0
  %279 = vmatprep.subr.mxu0 0.0
  %280 = vmatpush1.msra.mxu0 0.0
  %281 = vmatprep.subr.mxu0 0.0
  %282 = vmatpush1.msra.mxu0 0.0
  %283 = vmatprep.subr.mxu0 0.0
  %284 = vmatpush1.msra.mxu0 0.0
  %285 = vmatprep.subr.mxu0 0.0
  %286 = vmatpush1.msra.mxu0 0.0
  %287 = vmatprep.subr.mxu0 0.0
  %288 = vmatpush1.msra.mxu0 0.0
  %289 = vmatprep.mubr.f32.mxu0 0.0
  %290 = vmatmul.mubr.f32.gmra.mrb[0].mxu0 %v223
  %v291 = vpop.f32.mrb[0].mxu0
  %v292 = vadd.f32 %v220, %v291
  %v293 = vpop.f32.mrb[0].mxu0
  %294 = vdwg.mxu0
  %vm295 = vcmask 519168
  %v296 = vsel %vm295, %v292, 0.0
  %v297 = vrot.slane %v296, 4
  %v298 = vadd.f32 %v296, %v297
  %v299 = vrot.slane %v298, 2
  %v300 = vadd.f32 %v298, %v299
  %v301 = vrot.slane %v300, 1
  %v302 = vadd.f32 %v300, %v301
  %v303 = vmul.f32 %v302, %v189
  %v304 = vsub.f32 %v292, %v303
  %v305 = vmul.f32 %v304, %v304
  %v306 = vsel %vm295, %v305, 0.0
  %v307 = vrot.slane %v306, 4
  %v308 = vadd.f32 %v306, %v307
  %v309 = vrot.slane %v308, 2
  %v310 = vadd.f32 %v308, %v309
  %v311 = vrot.slane %v310, 1
  %v312 = vadd.f32 %v310, %v311
  %v313 = vmul.f32 %v312, %v189
  %v314 = vadd.f32 %v313, 1e-05
  %v315 = vrsqrt.pop %v314
  %v316 = vmul.f32 %v304, %v315
  %v317 = vlaneseq
  %v318 = vshrl.u32 %v317, 7
  %v319 = vsub.s32 0, %v318
  %v320 = vrot.slane %v80, %v319
  %v321 = vmul.f32 %v316, %v320
  %v322 = vlaneseq
  %v323 = vshrl.u32 %v322, 7
  %v324 = vsub.s32 0, %v323
  %v325 = vrot.slane %v81, %v324
  %v326 = vadd.f32 %v321, %v325
  %327 = vset.pattern.permute.xlu0 80
  %328 = vperm.xlu0 %327, %v14
  %v329 = vpop.permute.xlu0 %328
  %v331 = vmul.f32 %v326, %v329
  %332 = vset.pattern.permute.xlu0 81
  %333 = vperm.xlu0 %332, %v14
  %v334 = vpop.permute.xlu0 %333
  %v336 = vmul.f32 %v326, %v334
  %338 = vrot.lane.b32.xlu0 %v336, 96
  %v339 = vpop.permute.xlu0 %338
  %v341 = vadd.f32 %v331, %v339
  %342 = vrot.lane.b32.xlu0 %v14, 127
  %v343 = vpop.permute.xlu0 %342
  %v345 = vadd.f32 %v14, %v343
  %v346 = vmax.f32 %v345, 1.0
  %v347 = vrcp.pop %v346
  %349 = vset.pattern.permute.xlu0 80
  %350 = vperm.xlu0 %349, %v347
  %v351 = vpop.permute.xlu0 %350
  %v353 = vmul.f32 %v341, %v351
  %v354 = vlaneseq
  %v355 = vshrl.u32 %v354, 7
  %v356 = vsub.s32 0, %v355
  %v357 = vrot.slane %v82, %v356
  %vm358 = vcmask 261120
  %v360 = vsel %vm358, %v353, 0
  %362 = vmatprep.subr.mxu0 0.0
  %363 = vmatpush1.msra.mxu0 %v32
  %364 = vmatprep.subr.mxu0 0.0
  %365 = vmatpush1.msra.mxu0 %v33
  %366 = vmatprep.subr.mxu0 0.0
  %367 = vmatpush1.msra.mxu0 %v34
  %368 = vmatprep.subr.mxu0 0.0
  %369 = vmatpush1.msra.mxu0 %v35
  %370 = vmatprep.subr.mxu0 0.0
  %371 = vmatpush1.msra.mxu0 0.0
  %372 = vmatprep.subr.mxu0 0.0
  %373 = vmatpush1.msra.mxu0 0.0
  %374 = vmatprep.subr.mxu0 0.0
  %375 = vmatpush1.msra.mxu0 0.0
  %376 = vmatprep.subr.mxu0 0.0
  %377 = vmatpush1.msra.mxu0 0.0
  %378 = vmatprep.subr.mxu0 0.0
  %379 = vmatpush1.msra.mxu0 0.0
  %380 = vmatprep.subr.mxu0 0.0
  %381 = vmatpush1.msra.mxu0 0.0
  %382 = vmatprep.subr.mxu0 0.0
  %383 = vmatpush1.msra.mxu0 0.0
  %384 = vmatprep.subr.mxu0 0.0
  %385 = vmatpush1.msra.mxu0 0.0
  %386 = vmatprep.subr.mxu0 0.0
  %387 = vmatpush1.msra.mxu0 0.0
  %388 = vmatprep.subr.mxu0 0.0
  %389 = vmatpush1.msra.mxu0 0.0
  %390 = vmatprep.subr.mxu0 0.0
  %391 = vmatpush1.msra.mxu0 0.0
  %392 = vmatprep.subr.mxu0 0.0
  %393 = vmatpush1.msra.mxu0 0.0
  %394 = vmatprep.subr.mxu0 0.0
  %395 = vmatpush1.msra.mxu0 0.0
  %396 = vmatprep.subr.mxu0 0.0
  %397 = vmatpush1.msra.mxu0 0.0
  %398 = vmatprep.subr.mxu0 0.0
  %399 = vmatpush1.msra.mxu0 0.0
  %400 = vmatprep.subr.mxu0 0.0
  %401 = vmatpush1.msra.mxu0 0.0
  %402 = vmatprep.subr.mxu0 0.0
  %403 = vmatpush1.msra.mxu0 0.0
  %404 = vmatprep.subr.mxu0 0.0
  %405 = vmatpush1.msra.mxu0 0.0
  %406 = vmatprep.subr.mxu0 0.0
  %407 = vmatpush1.msra.mxu0 0.0
  %408 = vmatprep.subr.mxu0 0.0
  %409 = vmatpush1.msra.mxu0 0.0
  %410 = vmatprep.subr.mxu0 0.0
  %411 = vmatpush1.msra.mxu0 0.0
  %412 = vmatprep.subr.mxu0 0.0
  %413 = vmatpush1.msra.mxu0 0.0
  %414 = vmatprep.subr.mxu0 0.0
  %415 = vmatpush1.msra.mxu0 0.0
  %416 = vmatprep.subr.mxu0 0.0
  %417 = vmatpush1.msra.mxu0 0.0
  %418 = vmatprep.subr.mxu0 0.0
  %419 = vmatpush1.msra.mxu0 0.0
  %420 = vmatprep.subr.mxu0 0.0
  %421 = vmatpush1.msra.mxu0 0.0
  %422 = vmatprep.subr.mxu0 0.0
  %423 = vmatpush1.msra.mxu0 0.0
  %424 = vmatprep.subr.mxu0 0.0
  %425 = vmatpush1.msra.mxu0 0.0
  %426 = vmatprep.mubr.f32.mxu0 0.0
  %427 = vmatmul.mubr.f32.gmra.mrb[0].mxu0 %v360
  %v428 = vpop.f32.mrb[0].mxu0
  %v429 = vadd.f32 %v357, %v428
  %v430 = vpop.f32.mrb[0].mxu0
  %431 = vdwg.mxu0
  %v432 = vsel %vm181, %v429, 0.0
  %v433 = vrot.slane %v432, 4
  %v434 = vadd.f32 %v432, %v433
  %v435 = vrot.slane %v434, 2
  %v436 = vadd.f32 %v434, %v435
  %v437 = vrot.slane %v436, 1
  %v438 = vadd.f32 %v436, %v437
  %v439 = vmul.f32 %v438, %v189
  %v440 = vsub.f32 %v429, %v439
  %v441 = vmul.f32 %v440, %v440
  %v442 = vsel %vm181, %v441, 0.0
  %v443 = vrot.slane %v442, 4
  %v444 = vadd.f32 %v442, %v443
  %v445 = vrot.slane %v444, 2
  %v446 = vadd.f32 %v444, %v445
  %v447 = vrot.slane %v446, 1
  %v448 = vadd.f32 %v446, %v447
  %v449 = vmul.f32 %v448, %v189
  %v450 = vadd.f32 %v449, 1e-05
  %v451 = vrsqrt.pop %v450
  %v452 = vmul.f32 %v440, %v451
  %v453 = vlaneseq
  %v454 = vshrl.u32 %v453, 7
  %v455 = vsub.s32 0, %v454
  %v456 = vrot.slane %v83, %v455
  %v457 = vmul.f32 %v452, %v456
  %v458 = vlaneseq
  %v459 = vshrl.u32 %v458, 7
  %v460 = vsub.s32 0, %v459
  %v461 = vrot.slane %v84, %v460
  %v462 = vadd.f32 %v457, %v461
  %vm463 = vcmp.gt.f32.partialorder %v462, 0.0
  %v464 = vmul.f32 %v462, 0.2
  %v465 = vsel %vm463, %v462, %v464
  %v466 = vlaneseq
  %v467 = vshrl.u32 %v466, 7
  %v468 = vsub.s32 0, %v467
  %v469 = vrot.slane %v85, %v468
  %v471 = vsel %vm221, %v465, 0
  %473 = vmatprep.subr.mxu0 0.0
  %474 = vmatpush1.msra.mxu0 %v36
  %475 = vmatprep.subr.mxu0 0.0
  %476 = vmatpush1.msra.mxu0 %v37
  %477 = vmatprep.subr.mxu0 0.0
  %478 = vmatpush1.msra.mxu0 %v38
  %479 = vmatprep.subr.mxu0 0.0
  %480 = vmatpush1.msra.mxu0 %v39
  %481 = vmatprep.subr.mxu0 0.0
  %482 = vmatpush1.msra.mxu0 %v40
  %483 = vmatprep.subr.mxu0 0.0
  %484 = vmatpush1.msra.mxu0 %v41
  %485 = vmatprep.subr.mxu0 0.0
  %486 = vmatpush1.msra.mxu0 %v42
  %487 = vmatprep.subr.mxu0 0.0
  %488 = vmatpush1.msra.mxu0 %v43
  %489 = vmatprep.subr.mxu0 0.0
  %490 = vmatpush1.msra.mxu0 %v44
  %491 = vmatprep.subr.mxu0 0.0
  %492 = vmatpush1.msra.mxu0 %v45
  %493 = vmatprep.subr.mxu0 0.0
  %494 = vmatpush1.msra.mxu0 %v46
  %495 = vmatprep.subr.mxu0 0.0
  %496 = vmatpush1.msra.mxu0 %v47
  %497 = vmatprep.subr.mxu0 0.0
  %498 = vmatpush1.msra.mxu0 0.0
  %499 = vmatprep.subr.mxu0 0.0
  %500 = vmatpush1.msra.mxu0 0.0
  %501 = vmatprep.subr.mxu0 0.0
  %502 = vmatpush1.msra.mxu0 0.0
  %503 = vmatprep.subr.mxu0 0.0
  %504 = vmatpush1.msra.mxu0 0.0
  %505 = vmatprep.subr.mxu0 0.0
  %506 = vmatpush1.msra.mxu0 0.0
  %507 = vmatprep.subr.mxu0 0.0
  %508 = vmatpush1.msra.mxu0 0.0
  %509 = vmatprep.subr.mxu0 0.0
  %510 = vmatpush1.msra.mxu0 0.0
  %511 = vmatprep.subr.mxu0 0.0
  %512 = vmatpush1.msra.mxu0 0.0
  %513 = vmatprep.subr.mxu0 0.0
  %514 = vmatpush1.msra.mxu0 0.0
  %515 = vmatprep.subr.mxu0 0.0
  %516 = vmatpush1.msra.mxu0 0.0
  %517 = vmatprep.subr.mxu0 0.0
  %518 = vmatpush1.msra.mxu0 0.0
  %519 = vmatprep.subr.mxu0 0.0
  %520 = vmatpush1.msra.mxu0 0.0
  %521 = vmatprep.subr.mxu0 0.0
  %522 = vmatpush1.msra.mxu0 0.0
  %523 = vmatprep.subr.mxu0 0.0
  %524 = vmatpush1.msra.mxu0 0.0
  %525 = vmatprep.subr.mxu0 0.0
  %526 = vmatpush1.msra.mxu0 0.0
  %527 = vmatprep.subr.mxu0 0.0
  %528 = vmatpush1.msra.mxu0 0.0
  %529 = vmatprep.subr.mxu0 0.0
  %530 = vmatpush1.msra.mxu0 0.0
  %531 = vmatprep.subr.mxu0 0.0
  %532 = vmatpush1.msra.mxu0 0.0
  %533 = vmatprep.subr.mxu0 0.0
  %534 = vmatpush1.msra.mxu0 0.0
  %535 = vmatprep.subr.mxu0 0.0
  %536 = vmatpush1.msra.mxu0 0.0
  %537 = vmatprep.mubr.f32.mxu0 0.0
  %538 = vmatmul.mubr.f32.gmra.mrb[0].mxu0 %v471
  %v539 = vpop.f32.mrb[0].mxu0
  %v540 = vadd.f32 %v469, %v539
  %v541 = vpop.f32.mrb[0].mxu0
  %542 = vdwg.mxu0
  %vm543 = vcmask 322560
  %v544 = vsel %vm543, %v540, 0.0
  %v545 = vrot.slane %v544, 4
  %v546 = vadd.f32 %v544, %v545
  %v547 = vrot.slane %v546, 2
  %v548 = vadd.f32 %v546, %v547
  %v549 = vrot.slane %v548, 1
  %v550 = vadd.f32 %v548, %v549
  %v551 = vmul.f32 %v550, %v189
  %v552 = vsub.f32 %v540, %v551
  %v553 = vmul.f32 %v552, %v552
  %v554 = vsel %vm543, %v553, 0.0
  %v555 = vrot.slane %v554, 4
  %v556 = vadd.f32 %v554, %v555
  %v557 = vrot.slane %v556, 2
  %v558 = vadd.f32 %v556, %v557
  %v559 = vrot.slane %v558, 1
  %v560 = vadd.f32 %v558, %v559
  %v561 = vmul.f32 %v560, %v189
  %v562 = vadd.f32 %v561, 1e-05
  %v563 = vrsqrt.pop %v562
  %v564 = vmul.f32 %v552, %v563
  %v565 = vlaneseq
  %v566 = vshrl.u32 %v565, 7
  %v567 = vsub.s32 0, %v566
  %v568 = vrot.slane %v86, %v567
  %v569 = vmul.f32 %v564, %v568
  %v570 = vlaneseq
  %v571 = vshrl.u32 %v570, 7
  %v572 = vsub.s32 0, %v571
  %v573 = vrot.slane %v87, %v572
  %v574 = vadd.f32 %v569, %v573
  %vm575 = vcmp.gt.f32.partialorder %v14, 0.0
  %576 = vrot.lane.b32.xlu0 %v14, 40
  %v577 = vpop.permute.xlu0 %576
  %580 = vrot.lane.b32.xlu0 %v574, 40
  %v581 = vpop.permute.xlu0 %580
  %v583 = vsel %vm575, %v577, %v581
  %v584 = vmul.f32 %v583, %v583
  %586 = vrot.lane.b32.xlu0 %v584, 88
  %v587 = vpop.permute.xlu0 %586
  %vm589 = vcmask 191488
  %v590 = vsel %vm589, %v587, 0.0
  %591 = vadd.xlane.f32.xlu0 %v590
  %v592 = vpop.xlane.xlu0 %591
  %v593 = vmax.f32 %v592, 1e-24
  %v594 = vrsqrt.pop %v593
  %v595 = vmul.f32 %v583, %v594
  %596 = vrot.lane.b32.xlu0 %v584, 64
  %v597 = vpop.permute.xlu0 %596
  %vm599 = vcmask 125952
  %v600 = vsel %vm599, %v597, 0.0
  %601 = vadd.xlane.f32.xlu0 %v600
  %v602 = vpop.xlane.xlu0 %601
  %v603 = vmax.f32 %v602, 1e-24
  %v604 = vrsqrt.pop %v603
  %v605 = vmul.f32 %v583, %v604
  %607 = vrot.lane.b32.xlu0 %v583, 88
  %v608 = vpop.permute.xlu0 %607
  %v609 = vsel %vm107, %v608, 0
  %611 = vmatprep.subr.mxu0 0.0
  %612 = vmatpush1.msra.mxu0 %v15
  %613 = vmatprep.subr.mxu0 0.0
  %614 = vmatpush1.msra.mxu0 %v16
  %615 = vmatprep.subr.mxu0 0.0
  %616 = vmatpush1.msra.mxu0 %v17
  %617 = vmatprep.subr.mxu0 0.0
  %618 = vmatpush1.msra.mxu0 %v18
  %619 = vmatprep.subr.mxu0 0.0
  %620 = vmatpush1.msra.mxu0 %v19
  %621 = vmatprep.subr.mxu0 0.0
  %622 = vmatpush1.msra.mxu0 0.0
  %623 = vmatprep.subr.mxu0 0.0
  %624 = vmatpush1.msra.mxu0 0.0
  %625 = vmatprep.subr.mxu0 0.0
  %626 = vmatpush1.msra.mxu0 0.0
  %627 = vmatprep.subr.mxu0 0.0
  %628 = vmatpush1.msra.mxu0 0.0
  %629 = vmatprep.subr.mxu0 0.0
  %630 = vmatpush1.msra.mxu0 0.0
  %631 = vmatprep.subr.mxu0 0.0
  %632 = vmatpush1.msra.mxu0 0.0
  %633 = vmatprep.subr.mxu0 0.0
  %634 = vmatpush1.msra.mxu0 0.0
  %635 = vmatprep.subr.mxu0 0.0
  %636 = vmatpush1.msra.mxu0 0.0
  %637 = vmatprep.subr.mxu0 0.0
  %638 = vmatpush1.msra.mxu0 0.0
  %639 = vmatprep.subr.mxu0 0.0
  %640 = vmatpush1.msra.mxu0 0.0
  %641 = vmatprep.subr.mxu0 0.0
  %642 = vmatpush1.msra.mxu0 0.0
  %643 = vmatprep.subr.mxu0 0.0
  %644 = vmatpush1.msra.mxu0 0.0
  %645 = vmatprep.subr.mxu0 0.0
  %646 = vmatpush1.msra.mxu0 0.0
  %647 = vmatprep.subr.mxu0 0.0
  %648 = vmatpush1.msra.mxu0 0.0
  %649 = vmatprep.subr.mxu0 0.0
  %650 = vmatpush1.msra.mxu0 0.0
  %651 = vmatprep.subr.mxu0 0.0
  %652 = vmatpush1.msra.mxu0 0.0
  %653 = vmatprep.subr.mxu0 0.0
  %654 = vmatpush1.msra.mxu0 0.0
  %655 = vmatprep.subr.mxu0 0.0
  %656 = vmatpush1.msra.mxu0 0.0
  %657 = vmatprep.subr.mxu0 0.0
  %658 = vmatpush1.msra.mxu0 0.0
  %659 = vmatprep.subr.mxu0 0.0
  %660 = vmatpush1.msra.mxu0 0.0
  %661 = vmatprep.subr.mxu0 0.0
  %662 = vmatpush1.msra.mxu0 0.0
  %663 = vmatprep.subr.mxu0 0.0
  %664 = vmatpush1.msra.mxu0 0.0
  %665 = vmatprep.subr.mxu0 0.0
  %666 = vmatpush1.msra.mxu0 0.0
  %667 = vmatprep.subr.mxu0 0.0
  %668 = vmatpush1.msra.mxu0 0.0
  %669 = vmatprep.subr.mxu0 0.0
  %670 = vmatpush1.msra.mxu0 0.0
  %671 = vmatprep.subr.mxu0 0.0
  %672 = vmatpush1.msra.mxu0 0.0
  %673 = vmatprep.subr.mxu0 0.0
  %674 = vmatpush1.msra.mxu0 0.0
  %675 = vmatprep.mubr.f32.mxu0 0.0
  %676 = vmatmul.mubr.f32.gmra.mrb[0].mxu0 %v609
  %v677 = vpop.f32.mrb[0].mxu0
  %v678 = vadd.f32 %v106, %v677
  %v679 = vpop.f32.mrb[0].mxu0
  %680 = vdwg.mxu0
  %v681 = vsel %vm181, %v678, 0.0
  %v682 = vrot.slane %v681, 4
  %v683 = vadd.f32 %v681, %v682
  %v684 = vrot.slane %v683, 2
  %v685 = vadd.f32 %v683, %v684
  %v686 = vrot.slane %v685, 1
  %v687 = vadd.f32 %v685, %v686
  %v688 = vmul.f32 %v687, %v189
  %v689 = vsub.f32 %v678, %v688
  %v690 = vmul.f32 %v689, %v689
  %v691 = vsel %vm181, %v690, 0.0
  %v692 = vrot.slane %v691, 4
  %v693 = vadd.f32 %v691, %v692
  %v694 = vrot.slane %v693, 2
  %v695 = vadd.f32 %v693, %v694
  %v696 = vrot.slane %v695, 1
  %v697 = vadd.f32 %v695, %v696
  %v698 = vmul.f32 %v697, %v189
  %v699 = vadd.f32 %v698, 1e-05
  %v700 = vrsqrt.pop %v699
  %v701 = vmul.f32 %v689, %v700
  %v702 = vmul.f32 %v701, %v207
  %v703 = vadd.f32 %v702, %v212
  %vm704 = vcmp.gt.f32.partialorder %v703, 0.0
  %v705 = vmul.f32 %v703, 0.2
  %v706 = vsel %vm704, %v703, %v705
  %v708 = vsel %vm221, %v706, 0
  %710 = vmatprep.subr.mxu0 0.0
  %711 = vmatpush1.msra.mxu0 %v20
  %712 = vmatprep.subr.mxu0 0.0
  %713 = vmatpush1.msra.mxu0 %v21
  %714 = vmatprep.subr.mxu0 0.0
  %715 = vmatpush1.msra.mxu0 %v22
  %716 = vmatprep.subr.mxu0 0.0
  %717 = vmatpush1.msra.mxu0 %v23
  %718 = vmatprep.subr.mxu0 0.0
  %719 = vmatpush1.msra.mxu0 %v24
  %720 = vmatprep.subr.mxu0 0.0
  %721 = vmatpush1.msra.mxu0 %v25
  %722 = vmatprep.subr.mxu0 0.0
  %723 = vmatpush1.msra.mxu0 %v26
  %724 = vmatprep.subr.mxu0 0.0
  %725 = vmatpush1.msra.mxu0 %v27
  %726 = vmatprep.subr.mxu0 0.0
  %727 = vmatpush1.msra.mxu0 %v28
  %728 = vmatprep.subr.mxu0 0.0
  %729 = vmatpush1.msra.mxu0 %v29
  %730 = vmatprep.subr.mxu0 0.0
  %731 = vmatpush1.msra.mxu0 %v30
  %732 = vmatprep.subr.mxu0 0.0
  %733 = vmatpush1.msra.mxu0 %v31
  %734 = vmatprep.subr.mxu0 0.0
  %735 = vmatpush1.msra.mxu0 0.0
  %736 = vmatprep.subr.mxu0 0.0
  %737 = vmatpush1.msra.mxu0 0.0
  %738 = vmatprep.subr.mxu0 0.0
  %739 = vmatpush1.msra.mxu0 0.0
  %740 = vmatprep.subr.mxu0 0.0
  %741 = vmatpush1.msra.mxu0 0.0
  %742 = vmatprep.subr.mxu0 0.0
  %743 = vmatpush1.msra.mxu0 0.0
  %744 = vmatprep.subr.mxu0 0.0
  %745 = vmatpush1.msra.mxu0 0.0
  %746 = vmatprep.subr.mxu0 0.0
  %747 = vmatpush1.msra.mxu0 0.0
  %748 = vmatprep.subr.mxu0 0.0
  %749 = vmatpush1.msra.mxu0 0.0
  %750 = vmatprep.subr.mxu0 0.0
  %751 = vmatpush1.msra.mxu0 0.0
  %752 = vmatprep.subr.mxu0 0.0
  %753 = vmatpush1.msra.mxu0 0.0
  %754 = vmatprep.subr.mxu0 0.0
  %755 = vmatpush1.msra.mxu0 0.0
  %756 = vmatprep.subr.mxu0 0.0
  %757 = vmatpush1.msra.mxu0 0.0
  %758 = vmatprep.subr.mxu0 0.0
  %759 = vmatpush1.msra.mxu0 0.0
  %760 = vmatprep.subr.mxu0 0.0
  %761 = vmatpush1.msra.mxu0 0.0
  %762 = vmatprep.subr.mxu0 0.0
  %763 = vmatpush1.msra.mxu0 0.0
  %764 = vmatprep.subr.mxu0 0.0
  %765 = vmatpush1.msra.mxu0 0.0
  %766 = vmatprep.subr.mxu0 0.0
  %767 = vmatpush1.msra.mxu0 0.0
  %768 = vmatprep.subr.mxu0 0.0
  %769 = vmatpush1.msra.mxu0 0.0
  %770 = vmatprep.subr.mxu0 0.0
  %771 = vmatpush1.msra.mxu0 0.0
  %772 = vmatprep.subr.mxu0 0.0
  %773 = vmatpush1.msra.mxu0 0.0
  %774 = vmatprep.mubr.f32.mxu0 0.0
  %775 = vmatmul.mubr.f32.gmra.mrb[0].mxu0 %v708
  %v776 = vpop.f32.mrb[0].mxu0
  %v777 = vadd.f32 %v220, %v776
  %v778 = vpop.f32.mrb[0].mxu0
  %779 = vdwg.mxu0
  %v780 = vsel %vm295, %v777, 0.0
  %v781 = vrot.slane %v780, 4
  %v782 = vadd.f32 %v780, %v781
  %v783 = vrot.slane %v782, 2
  %v784 = vadd.f32 %v782, %v783
  %v785 = vrot.slane %v784, 1
  %v786 = vadd.f32 %v784, %v785
  %v787 = vmul.f32 %v786, %v189
  %v788 = vsub.f32 %v777, %v787
  %v789 = vmul.f32 %v788, %v788
  %v790 = vsel %vm295, %v789, 0.0
  %v791 = vrot.slane %v790, 4
  %v792 = vadd.f32 %v790, %v791
  %v793 = vrot.slane %v792, 2
  %v794 = vadd.f32 %v792, %v793
  %v795 = vrot.slane %v794, 1
  %v796 = vadd.f32 %v794, %v795
  %v797 = vmul.f32 %v796, %v189
  %v798 = vadd.f32 %v797, 1e-05
  %v799 = vrsqrt.pop %v798
  %v800 = vmul.f32 %v788, %v799
  %v801 = vmul.f32 %v800, %v320
  %v802 = vadd.f32 %v801, %v325
  %v803 = vmul.f32 %v802, %v802
  %vm804 = vcmask 257024
  %v805 = vsel %vm804, %v803, 0.0
  %806 = vadd.xlane.f32.xlu0 %v805
  %v807 = vpop.xlane.xlu0 %806
  %v808 = vmax.f32 %v807, 1e-24
  %v809 = vrsqrt.pop %v808
  %v810 = vmul.f32 %v802, %v809
  %812 = vrot.lane.b32.xlu0 %v803, 96
  %v813 = vpop.permute.xlu0 %812
  %v815 = vsel %vm804, %v813, 0.0
  %816 = vadd.xlane.f32.xlu0 %v815
  %v817 = vpop.xlane.xlu0 %816
  %v818 = vmax.f32 %v817, 1e-24
  %v819 = vrsqrt.pop %v818
  %v820 = vmul.f32 %v802, %v819
  %v821 = vlaneseq
  %v822 = vshrl.u32 %v821, 7
  %v823 = vsub.s32 0, %v822
  %v824 = vrot.slane %v88, %v823
  %v825 = vlaneseq
  %v826 = vshrl.u32 %v825, 7
  %v827 = vsub.s32 0, %v826
  %v828 = vrot.slane %v89, %v827
  %v829 = vadd.f32 %v802, %v828
  %v830 = vlaneseq
  %v831 = vshrl.u32 %v830, 7
  %v832 = vsub.s32 0, %v831
  %v833 = vrot.slane %v90, %v832
  %835 = vrot.lane.b32.xlu0 %v833, 32
  %v836 = vpop.permute.xlu0 %835
  %v838 = vadd.f32 %v802, %v836
  %v840 = vrot.slane %v829, 4
  %843 = vrot.lane.b32.xlu0 %v838, 96
  %v844 = vpop.permute.xlu0 %843
  %vm846 = vcmask 1043456
  %v847 = vsel %vm846, %v824, %v840
  %v848 = vsel %vm358, %v847, 0.0
  %849 = vadd.xlane.f32.xlu0 %v848
  %v850 = vpop.xlane.xlu0 %849
  %v851 = vsel %vm804, %v844, 0.0
  %852 = vadd.xlane.f32.xlu0 %v851
  %v853 = vpop.xlane.xlu0 %852
  %v854 = vrcp.pop 32.0
  %v855 = vmul.f32 %v850, %v854
  %v856 = vmul.f32 %v853, %v854
  %v857 = vsub.f32 %v847, %v855
  %v858 = vsub.f32 %v844, %v856
  %v859 = vmul.f32 %v857, %v857
  %v860 = vmul.f32 %v858, %v858
  %v861 = vsel %vm358, %v859, 0.0
  %862 = vadd.xlane.f32.xlu0 %v861
  %v863 = vpop.xlane.xlu0 %862
  %v864 = vsel %vm804, %v860, 0.0
  %865 = vadd.xlane.f32.xlu0 %v864
  %v866 = vpop.xlane.xlu0 %865
  %v867 = vmul.f32 %v863, %v854
  %v868 = vmul.f32 %v866, %v854
  %v869 = vadd.f32 %v867, 1e-12
  %v870 = vadd.f32 %v868, 1e-12
  %v871 = vrsqrt.pop %v869
  %v872 = vrsqrt.pop %v870
  %v873 = vmul.f32 %v857, %v871
  %v874 = vmul.f32 %v858, %v872
  %v875 = vlaneseq
  %v876 = vshrl.u32 %v875, 7
  %v877 = vsub.s32 0, %v876
  %v878 = vrot.slane %v91, %v877
  %v879 = vmul.f32 %v873, %v878
  %v880 = vmul.f32 %v874, %v878
  %v881 = vlaneseq
  %v882 = vshrl.u32 %v881, 7
  %v883 = vsub.s32 0, %v882
  %v884 = vrot.slane %v92, %v883
  %v885 = vadd.f32 %v879, %v884
  %v886 = vadd.f32 %v880, %v884
  %v887 = vlaneseq
  %v888 = vshrl.u32 %v887, 7
  %v889 = vsub.s32 0, %v888
  %v890 = vrot.slane %v93, %v889
  %v892 = vsel %vm358, %v885, 0
  %v895 = vsel %vm358, %v886, 0
  %897 = vmatprep.subr.mxu0 0.0
  %898 = vmatpush1.msra.mxu0 %v48
  %899 = vmatprep.subr.mxu0 0.0
  %900 = vmatpush1.msra.mxu0 %v49
  %901 = vmatprep.subr.mxu0 0.0
  %902 = vmatpush1.msra.mxu0 %v50
  %903 = vmatprep.subr.mxu0 0.0
  %904 = vmatpush1.msra.mxu0 %v51
  %905 = vmatprep.subr.mxu0 0.0
  %906 = vmatpush1.msra.mxu0 0.0
  %907 = vmatprep.subr.mxu0 0.0
  %908 = vmatpush1.msra.mxu0 0.0
  %909 = vmatprep.subr.mxu0 0.0
  %910 = vmatpush1.msra.mxu0 0.0
  %911 = vmatprep.subr.mxu0 0.0
  %912 = vmatpush1.msra.mxu0 0.0
  %913 = vmatprep.subr.mxu0 0.0
  %914 = vmatpush1.msra.mxu0 0.0
  %915 = vmatprep.subr.mxu0 0.0
  %916 = vmatpush1.msra.mxu0 0.0
  %917 = vmatprep.subr.mxu0 0.0
  %918 = vmatpush1.msra.mxu0 0.0
  %919 = vmatprep.subr.mxu0 0.0
  %920 = vmatpush1.msra.mxu0 0.0
  %921 = vmatprep.subr.mxu0 0.0
  %922 = vmatpush1.msra.mxu0 0.0
  %923 = vmatprep.subr.mxu0 0.0
  %924 = vmatpush1.msra.mxu0 0.0
  %925 = vmatprep.subr.mxu0 0.0
  %926 = vmatpush1.msra.mxu0 0.0
  %927 = vmatprep.subr.mxu0 0.0
  %928 = vmatpush1.msra.mxu0 0.0
  %929 = vmatprep.subr.mxu0 0.0
  %930 = vmatpush1.msra.mxu0 0.0
  %931 = vmatprep.subr.mxu0 0.0
  %932 = vmatpush1.msra.mxu0 0.0
  %933 = vmatprep.subr.mxu0 0.0
  %934 = vmatpush1.msra.mxu0 0.0
  %935 = vmatprep.subr.mxu0 0.0
  %936 = vmatpush1.msra.mxu0 0.0
  %937 = vmatprep.subr.mxu0 0.0
  %938 = vmatpush1.msra.mxu0 0.0
  %939 = vmatprep.subr.mxu0 0.0
  %940 = vmatpush1.msra.mxu0 0.0
  %941 = vmatprep.subr.mxu0 0.0
  %942 = vmatpush1.msra.mxu0 0.0
  %943 = vmatprep.subr.mxu0 0.0
  %944 = vmatpush1.msra.mxu0 0.0
  %945 = vmatprep.subr.mxu0 0.0
  %946 = vmatpush1.msra.mxu0 0.0
  %947 = vmatprep.subr.mxu0 0.0
  %948 = vmatpush1.msra.mxu0 0.0
  %949 = vmatprep.subr.mxu0 0.0
  %950 = vmatpush1.msra.mxu0 0.0
  %951 = vmatprep.subr.mxu0 0.0
  %952 = vmatpush1.msra.mxu0 0.0
  %953 = vmatprep.subr.mxu0 0.0
  %954 = vmatpush1.msra.mxu0 0.0
  %955 = vmatprep.subr.mxu0 0.0
  %956 = vmatpush1.msra.mxu0 0.0
  %957 = vmatprep.subr.mxu0 0.0
  %958 = vmatpush1.msra.mxu0 0.0
  %959 = vmatprep.subr.mxu0 0.0
  %960 = vmatpush1.msra.mxu0 0.0
  %961 = vmatprep.mubr.f32.mxu0 0.0
  %962 = vmatmul.mubr.f32.gmra.mrb[0].mxu0 %v892
  %v963 = vpop.f32.mrb[0].mxu0
  %v964 = vadd.f32 %v890, %v963
  %v965 = vpop.f32.mrb[0].mxu0
  %966 = vmatprep.mubr.f32.mxu0 0.0
  %967 = vmatmul.mubr.f32.gmra.mrb[0].mxu0 %v895
  %v968 = vpop.f32.mrb[0].mxu0
  %v969 = vadd.f32 %v890, %v968
  %v970 = vpop.f32.mrb[0].mxu0
  %971 = vdwg.mxu0
  %v972 = vsub.f32 1.0, %v14
  %v973 = vmul.f32 %v972, -1e+09
  %975 = vrot.lane.b32.xlu0 %v964, 96
  %v976 = vpop.permute.xlu0 %975
  %v978 = vmul.f32 %v964, %v976
  %v979 = vsel %vm804, %v978, 0.0
  %980 = vadd.xlane.f32.xlu0 %v979
  %v981 = vpop.xlane.xlu0 %980
  %v982 = vmul.f32 %v981, 0.17677669
  %v983 = vadd.f32 %v982, 0.0
  %v984 = vrot.slane %v964, 4
  %985 = vrot.lane.b32.xlu0 %v984, 96
  %v986 = vpop.permute.xlu0 %985
  %v988 = vmul.f32 %v964, %v986
  %v989 = vsel %vm804, %v988, 0.0
  %990 = vadd.xlane.f32.xlu0 %v989
  %v991 = vpop.xlane.xlu0 %990
  %v992 = vmul.f32 %v991, 0.17677669
  %v993 = vadd.f32 %v992, %v973
  %995 = vrot.lane.b32.xlu0 %v969, 96
  %v996 = vpop.permute.xlu0 %995
  %v998 = vmul.f32 %v964, %v996
  %v999 = vsel %vm804, %v998, 0.0
  %1000 = vadd.xlane.f32.xlu0 %v999
  %v1001 = vpop.xlane.xlu0 %1000
  %v1002 = vmul.f32 %v1001, 0.17677669
  %v1003 = vadd.f32 %v1002, %v973
  %v1004 = vmax.f32 %v983, %v993
  %1006 = vrot.lane.b32.xlu0 %v1003, 127
  %v1007 = vpop.permute.xlu0 %1006
  %v1009 = vmax.f32 %v1004, %v1007
  %v1010 = vsub.f32 %v983, %v1009
  %v1011 = vmul.f32 %v1010, 1.442695
  %v1012 = vpow.pop %v1011
  %v1013 = vsub.f32 %v993, %v1009
  %v1014 = vmul.f32 %v1013, 1.442695
  %v1015 = vpow.pop %v1014
  %1017 = vrot.lane.b32.xlu0 %v1009, 1
  %v1018 = vpop.permute.xlu0 %1017
  %v1020 = vsub.f32 %v1003, %v1018
  %v1021 = vmul.f32 %v1020, 1.442695
  %v1022 = vpow.pop %v1021
  %1024 = vset.pattern.permute.xlu0 80
  %1025 = vperm.xlu0 %1024, %v1012
  %v1026 = vpop.permute.xlu0 %1025
  %v1028 = vmul.f32 %v1026, %v964
  %v1029 = vadd.f32 %v1012, %v1015
  %1031 = vset.pattern.permute.xlu0 80
  %1032 = vperm.xlu0 %1031, %v1015
  %v1033 = vpop.permute.xlu0 %1032
  %1035 = vrot.lane.b32.xlu0 %v984, 64
  %v1036 = vpop.permute.xlu0 %1035
  %v1038 = vmul.f32 %v1033, %v1036
  %1040 = vrot.lane.b32.xlu0 %v1038, 64
  %v1041 = vpop.permute.xlu0 %1040
  %v1043 = vadd.f32 %v1028, %v1041
  %1045 = vrot.lane.b32.xlu0 %v1022, 127
  %v1046 = vpop.permute.xlu0 %1045
  %v1048 = vadd.f32 %v1029, %v1046
  %1049 = vset.pattern.permute.xlu0 81
  %1050 = vperm.xlu0 %1049, %v1022
  %v1051 = vpop.permute.xlu0 %1050
  %v1053 = vmul.f32 %v1051, %v969
  %v1054 = vadd.f32 %v1043, %v1053
  %v1055 = vrcp.pop %v1048
  %1057 = vset.pattern.permute.xlu0 80
  %1058 = vperm.xlu0 %1057, %v1055
  %v1059 = vpop.permute.xlu0 %1058
  %v1061 = vmul.f32 %v1054, %v1059
  %v1062 = vlaneseq
  %v1063 = vshrl.u32 %v1062, 7
  %v1064 = vsub.s32 0, %v1063
  %v1065 = vrot.slane %v94, %v1064
  %1067 = vrot.lane.b32.xlu0 %v1061, 64
  %v1068 = vpop.permute.xlu0 %1067
  %v1069 = vsel %vm358, %v1068, 0
  %1071 = vmatprep.subr.mxu0 0.0
  %1072 = vmatpush1.msra.mxu0 %v52
  %1073 = vmatprep.subr.mxu0 0.0
  %1074 = vmatpush1.msra.mxu0 %v53
  %1075 = vmatprep.subr.mxu0 0.0
  %1076 = vmatpush1.msra.mxu0 %v54
  %1077 = vmatprep.subr.mxu0 0.0
  %1078 = vmatpush1.msra.mxu0 %v55
  %1079 = vmatprep.subr.mxu0 0.0
  %1080 = vmatpush1.msra.mxu0 0.0
  %1081 = vmatprep.subr.mxu0 0.0
  %1082 = vmatpush1.msra.mxu0 0.0
  %1083 = vmatprep.subr.mxu0 0.0
  %1084 = vmatpush1.msra.mxu0 0.0
  %1085 = vmatprep.subr.mxu0 0.0
  %1086 = vmatpush1.msra.mxu0 0.0
  %1087 = vmatprep.subr.mxu0 0.0
  %1088 = vmatpush1.msra.mxu0 0.0
  %1089 = vmatprep.subr.mxu0 0.0
  %1090 = vmatpush1.msra.mxu0 0.0
  %1091 = vmatprep.subr.mxu0 0.0
  %1092 = vmatpush1.msra.mxu0 0.0
  %1093 = vmatprep.subr.mxu0 0.0
  %1094 = vmatpush1.msra.mxu0 0.0
  %1095 = vmatprep.subr.mxu0 0.0
  %1096 = vmatpush1.msra.mxu0 0.0
  %1097 = vmatprep.subr.mxu0 0.0
  %1098 = vmatpush1.msra.mxu0 0.0
  %1099 = vmatprep.subr.mxu0 0.0
  %1100 = vmatpush1.msra.mxu0 0.0
  %1101 = vmatprep.subr.mxu0 0.0
  %1102 = vmatpush1.msra.mxu0 0.0
  %1103 = vmatprep.subr.mxu0 0.0
  %1104 = vmatpush1.msra.mxu0 0.0
  %1105 = vmatprep.subr.mxu0 0.0
  %1106 = vmatpush1.msra.mxu0 0.0
  %1107 = vmatprep.subr.mxu0 0.0
  %1108 = vmatpush1.msra.mxu0 0.0
  %1109 = vmatprep.subr.mxu0 0.0
  %1110 = vmatpush1.msra.mxu0 0.0
  %1111 = vmatprep.subr.mxu0 0.0
  %1112 = vmatpush1.msra.mxu0 0.0
  %1113 = vmatprep.subr.mxu0 0.0
  %1114 = vmatpush1.msra.mxu0 0.0
  %1115 = vmatprep.subr.mxu0 0.0
  %1116 = vmatpush1.msra.mxu0 0.0
  %1117 = vmatprep.subr.mxu0 0.0
  %1118 = vmatpush1.msra.mxu0 0.0
  %1119 = vmatprep.subr.mxu0 0.0
  %1120 = vmatpush1.msra.mxu0 0.0
  %1121 = vmatprep.subr.mxu0 0.0
  %1122 = vmatpush1.msra.mxu0 0.0
  %1123 = vmatprep.subr.mxu0 0.0
  %1124 = vmatpush1.msra.mxu0 0.0
  %1125 = vmatprep.subr.mxu0 0.0
  %1126 = vmatpush1.msra.mxu0 0.0
  %1127 = vmatprep.subr.mxu0 0.0
  %1128 = vmatpush1.msra.mxu0 0.0
  %1129 = vmatprep.subr.mxu0 0.0
  %1130 = vmatpush1.msra.mxu0 0.0
  %1131 = vmatprep.subr.mxu0 0.0
  %1132 = vmatpush1.msra.mxu0 0.0
  %1133 = vmatprep.subr.mxu0 0.0
  %1134 = vmatpush1.msra.mxu0 0.0
  %1135 = vmatprep.mubr.f32.mxu0 0.0
  %1136 = vmatmul.mubr.f32.gmra.mrb[0].mxu0 %v1069
  %v1137 = vpop.f32.mrb[0].mxu0
  %v1138 = vadd.f32 %v1065, %v1137
  %v1139 = vpop.f32.mrb[0].mxu0
  %1140 = vdwg.mxu0
  %v1141 = vadd.f32 %v885, %v1138
  %v1142 = vsel %vm804, %v1141, 0.0
  %1143 = vadd.xlane.f32.xlu0 %v1142
  %v1144 = vpop.xlane.xlu0 %1143
  %v1145 = vmul.f32 %v1144, %v854
  %v1146 = vsub.f32 %v1141, %v1145
  %v1147 = vmul.f32 %v1146, %v1146
  %v1148 = vsel %vm804, %v1147, 0.0
  %1149 = vadd.xlane.f32.xlu0 %v1148
  %v1150 = vpop.xlane.xlu0 %1149
  %v1151 = vmul.f32 %v1150, %v854
  %v1152 = vadd.f32 %v1151, 1e-12
  %v1153 = vrsqrt.pop %v1152
  %v1154 = vmul.f32 %v1146, %v1153
  %v1155 = vlaneseq
  %v1156 = vshrl.u32 %v1155, 7
  %v1157 = vsub.s32 0, %v1156
  %v1158 = vrot.slane %v95, %v1157
  %v1159 = vmul.f32 %v1154, %v1158
  %v1160 = vlaneseq
  %v1161 = vshrl.u32 %v1160, 7
  %v1162 = vsub.s32 0, %v1161
  %v1163 = vrot.slane %v96, %v1162
  %v1164 = vadd.f32 %v1159, %v1163
  %v1165 = vlaneseq
  %v1166 = vshrl.u32 %v1165, 7
  %v1167 = vsub.s32 0, %v1166
  %v1168 = vrot.slane %v97, %v1167
  %v1170 = vsel %vm358, %v1164, 0
  %1172 = vmatprep.subr.mxu0 0.0
  %1173 = vmatpush1.msra.mxu0 %v56
  %1174 = vmatprep.subr.mxu0 0.0
  %1175 = vmatpush1.msra.mxu0 %v57
  %1176 = vmatprep.subr.mxu0 0.0
  %1177 = vmatpush1.msra.mxu0 %v58
  %1178 = vmatprep.subr.mxu0 0.0
  %1179 = vmatpush1.msra.mxu0 %v59
  %1180 = vmatprep.subr.mxu0 0.0
  %1181 = vmatpush1.msra.mxu0 0.0
  %1182 = vmatprep.subr.mxu0 0.0
  %1183 = vmatpush1.msra.mxu0 0.0
  %1184 = vmatprep.subr.mxu0 0.0
  %1185 = vmatpush1.msra.mxu0 0.0
  %1186 = vmatprep.subr.mxu0 0.0
  %1187 = vmatpush1.msra.mxu0 0.0
  %1188 = vmatprep.subr.mxu0 0.0
  %1189 = vmatpush1.msra.mxu0 0.0
  %1190 = vmatprep.subr.mxu0 0.0
  %1191 = vmatpush1.msra.mxu0 0.0
  %1192 = vmatprep.subr.mxu0 0.0
  %1193 = vmatpush1.msra.mxu0 0.0
  %1194 = vmatprep.subr.mxu0 0.0
  %1195 = vmatpush1.msra.mxu0 0.0
  %1196 = vmatprep.subr.mxu0 0.0
  %1197 = vmatpush1.msra.mxu0 0.0
  %1198 = vmatprep.subr.mxu0 0.0
  %1199 = vmatpush1.msra.mxu0 0.0
  %1200 = vmatprep.subr.mxu0 0.0
  %1201 = vmatpush1.msra.mxu0 0.0
  %1202 = vmatprep.subr.mxu0 0.0
  %1203 = vmatpush1.msra.mxu0 0.0
  %1204 = vmatprep.subr.mxu0 0.0
  %1205 = vmatpush1.msra.mxu0 0.0
  %1206 = vmatprep.subr.mxu0 0.0
  %1207 = vmatpush1.msra.mxu0 0.0
  %1208 = vmatprep.subr.mxu0 0.0
  %1209 = vmatpush1.msra.mxu0 0.0
  %1210 = vmatprep.subr.mxu0 0.0
  %1211 = vmatpush1.msra.mxu0 0.0
  %1212 = vmatprep.subr.mxu0 0.0
  %1213 = vmatpush1.msra.mxu0 0.0
  %1214 = vmatprep.subr.mxu0 0.0
  %1215 = vmatpush1.msra.mxu0 0.0
  %1216 = vmatprep.subr.mxu0 0.0
  %1217 = vmatpush1.msra.mxu0 0.0
  %1218 = vmatprep.subr.mxu0 0.0
  %1219 = vmatpush1.msra.mxu0 0.0
  %1220 = vmatprep.subr.mxu0 0.0
  %1221 = vmatpush1.msra.mxu0 0.0
  %1222 = vmatprep.subr.mxu0 0.0
  %1223 = vmatpush1.msra.mxu0 0.0
  %1224 = vmatprep.subr.mxu0 0.0
  %1225 = vmatpush1.msra.mxu0 0.0
  %1226 = vmatprep.subr.mxu0 0.0
  %1227 = vmatpush1.msra.mxu0 0.0
  %1228 = vmatprep.subr.mxu0 0.0
  %1229 = vmatpush1.msra.mxu0 0.0
  %1230 = vmatprep.subr.mxu0 0.0
  %1231 = vmatpush1.msra.mxu0 0.0
  %1232 = vmatprep.subr.mxu0 0.0
  %1233 = vmatpush1.msra.mxu0 0.0
  %1234 = vmatprep.subr.mxu0 0.0
  %1235 = vmatpush1.msra.mxu0 0.0
  %1236 = vmatprep.mubr.f32.mxu0 0.0
  %1237 = vmatmul.mubr.f32.gmra.mrb[0].mxu0 %v1170
  %v1238 = vpop.f32.mrb[0].mxu0
  %v1239 = vadd.f32 %v1168, %v1238
  %v1240 = vpop.f32.mrb[0].mxu0
  %1241 = vdwg.mxu0
  %v1242 = vmul.f32 %v1239, 0.5
  %v1243 = vmul.f32 %v1239, 0.70710677
  %v1244 = vand.u32 2147483647, %v1243
  %v1245 = vmul.f32 %v1244, 0.3275911
  %v1246 = vadd.f32 %v1245, 1.0
  %v1247 = vrcp.pop %v1246
  %v1248 = vmul.f32 1.0, %v1247
  %v1249 = vmul.f32 %v1248, 1.0614054
  %v1250 = vadd.f32 %v1249, -1.4531521
  %v1251 = vmul.f32 %v1248, %v1250
  %v1252 = vadd.f32 %v1251, 1.4214138
  %v1253 = vmul.f32 %v1248, %v1252
  %v1254 = vadd.f32 %v1253, -0.28449672
  %v1255 = vmul.f32 %v1248, %v1254
  %v1256 = vadd.f32 %v1255, 0.2548296
  %v1257 = vmul.f32 %v1248, %v1256
  %v1258 = vsub.f32 0.0, %v1244
  %v1259 = vmul.f32 %v1258, %v1244
  %v1260 = vmul.f32 %v1259, 1.442695
  %v1261 = vpow.pop %v1260
  %v1262 = vmul.f32 %v1257, %v1261
  %v1263 = vsub.f32 1.0, %v1262
  %vm1264 = vcmp.ge.f32.partialorder %v1243, 0.0
  %v1265 = vsub.f32 0.0, %v1263
  %v1266 = vsel %vm1264, %v1263, %v1265
  %v1267 = vadd.f32 %v1266, 1.0
  %v1268 = vmul.f32 %v1242, %v1267
  %v1269 = vlaneseq
  %v1270 = vshrl.u32 %v1269, 7
  %v1271 = vsub.s32 0, %v1270
  %v1272 = vrot.slane %v98, %v1271
  %vm1273 = vcmask 523264
  %v1275 = vsel %vm1273, %v1268, 0
  %1277 = vmatprep.subr.mxu0 0.0
  %1278 = vmatpush1.msra.mxu0 %v60
  %1279 = vmatprep.subr.mxu0 0.0
  %1280 = vmatpush1.msra.mxu0 %v61
  %1281 = vmatprep.subr.mxu0 0.0
  %1282 = vmatpush1.msra.mxu0 %v62
  %1283 = vmatprep.subr.mxu0 0.0
  %1284 = vmatpush1.msra.mxu0 %v63
  %1285 = vmatprep.subr.mxu0 0.0
  %1286 = vmatpush1.msra.mxu0 %v64
  %1287 = vmatprep.subr.mxu0 0.0
  %1288 = vmatpush1.msra.mxu0 %v65
  %1289 = vmatprep.subr.mxu0 0.0
  %1290 = vmatpush1.msra.mxu0 %v66
  %1291 = vmatprep.subr.mxu0 0.0
  %1292 = vmatpush1.msra.mxu0 %v67
  %1293 = vmatprep.subr.mxu0 0.0
  %1294 = vmatpush1.msra.mxu0 0.0
  %1295 = vmatprep.subr.mxu0 0.0
  %1296 = vmatpush1.msra.mxu0 0.0
  %1297 = vmatprep.subr.mxu0 0.0
  %1298 = vmatpush1.msra.mxu0 0.0
  %1299 = vmatprep.subr.mxu0 0.0
  %1300 = vmatpush1.msra.mxu0 0.0
  %1301 = vmatprep.subr.mxu0 0.0
  %1302 = vmatpush1.msra.mxu0 0.0
  %1303 = vmatprep.subr.mxu0 0.0
  %1304 = vmatpush1.msra.mxu0 0.0
  %1305 = vmatprep.subr.mxu0 0.0
  %1306 = vmatpush1.msra.mxu0 0.0
  %1307 = vmatprep.subr.mxu0 0.0
  %1308 = vmatpush1.msra.mxu0 0.0
  %1309 = vmatprep.subr.mxu0 0.0
  %1310 = vmatpush1.msra.mxu0 0.0
  %1311 = vmatprep.subr.mxu0 0.0
  %1312 = vmatpush1.msra.mxu0 0.0
  %1313 = vmatprep.subr.mxu0 0.0
  %1314 = vmatpush1.msra.mxu0 0.0
  %1315 = vmatprep.subr.mxu0 0.0
  %1316 = vmatpush1.msra.mxu0 0.0
  %1317 = vmatprep.subr.mxu0 0.0
  %1318 = vmatpush1.msra.mxu0 0.0
  %1319 = vmatprep.subr.mxu0 0.0
  %1320 = vmatpush1.msra.mxu0 0.0
  %1321 = vmatprep.subr.mxu0 0.0
  %1322 = vmatpush1.msra.mxu0 0.0
  %1323 = vmatprep.subr.mxu0 0.0
  %1324 = vmatpush1.msra.mxu0 0.0
  %1325 = vmatprep.subr.mxu0 0.0
  %1326 = vmatpush1.msra.mxu0 0.0
  %1327 = vmatprep.subr.mxu0 0.0
  %1328 = vmatpush1.msra.mxu0 0.0
  %1329 = vmatprep.subr.mxu0 0.0
  %1330 = vmatpush1.msra.mxu0 0.0
  %1331 = vmatprep.subr.mxu0 0.0
  %1332 = vmatpush1.msra.mxu0 0.0
  %1333 = vmatprep.subr.mxu0 0.0
  %1334 = vmatpush1.msra.mxu0 0.0
  %1335 = vmatprep.subr.mxu0 0.0
  %1336 = vmatpush1.msra.mxu0 0.0
  %1337 = vmatprep.subr.mxu0 0.0
  %1338 = vmatpush1.msra.mxu0 0.0
  %1339 = vmatprep.subr.mxu0 0.0
  %1340 = vmatpush1.msra.mxu0 0.0
  %1341 = vmatprep.mubr.f32.mxu0 0.0
  %1342 = vmatmul.mubr.f32.gmra.mrb[0].mxu0 %v1275
  %v1343 = vpop.f32.mrb[0].mxu0
  %v1344 = vadd.f32 %v1272, %v1343
  %v1345 = vpop.f32.mrb[0].mxu0
  %1346 = vdwg.mxu0
  %v1347 = vadd.f32 %v1164, %v1344
  %v1348 = vsel %vm804, %v1347, 0.0
  %1349 = vadd.xlane.f32.xlu0 %v1348
  %v1350 = vpop.xlane.xlu0 %1349
  %v1351 = vmul.f32 %v1350, %v854
  %v1352 = vsub.f32 %v1347, %v1351
  %v1353 = vmul.f32 %v1352, %v1352
  %v1354 = vsel %vm804, %v1353, 0.0
  %1355 = vadd.xlane.f32.xlu0 %v1354
  %v1356 = vpop.xlane.xlu0 %1355
  %v1357 = vmul.f32 %v1356, %v854
  %v1358 = vadd.f32 %v1357, 1e-12
  %v1359 = vrsqrt.pop %v1358
  %v1360 = vmul.f32 %v1352, %v1359
  %v1361 = vlaneseq
  %v1362 = vshrl.u32 %v1361, 7
  %v1363 = vsub.s32 0, %v1362
  %v1364 = vrot.slane %v99, %v1363
  %v1365 = vmul.f32 %v1360, %v1364
  %v1366 = vlaneseq
  %v1367 = vshrl.u32 %v1366, 7
  %v1368 = vsub.s32 0, %v1367
  %v1369 = vrot.slane %v100, %v1368
  %v1370 = vadd.f32 %v1365, %v1369
  %v1371 = vlaneseq
  %v1372 = vshrl.u32 %v1371, 7
  %v1373 = vsub.s32 0, %v1372
  %v1374 = vrot.slane %v101, %v1373
  %v1376 = vsel %vm358, %v1370, 0
  %1378 = vmatprep.subr.mxu0 0.0
  %1379 = vmatpush1.msra.mxu0 %v68
  %1380 = vmatprep.subr.mxu0 0.0
  %1381 = vmatpush1.msra.mxu0 %v69
  %1382 = vmatprep.subr.mxu0 0.0
  %1383 = vmatpush1.msra.mxu0 %v70
  %1384 = vmatprep.subr.mxu0 0.0
  %1385 = vmatpush1.msra.mxu0 %v71
  %1386 = vmatprep.subr.mxu0 0.0
  %1387 = vmatpush1.msra.mxu0 0.0
  %1388 = vmatprep.subr.mxu0 0.0
  %1389 = vmatpush1.msra.mxu0 0.0
  %1390 = vmatprep.subr.mxu0 0.0
  %1391 = vmatpush1.msra.mxu0 0.0
  %1392 = vmatprep.subr.mxu0 0.0
  %1393 = vmatpush1.msra.mxu0 0.0
  %1394 = vmatprep.subr.mxu0 0.0
  %1395 = vmatpush1.msra.mxu0 0.0
  %1396 = vmatprep.subr.mxu0 0.0
  %1397 = vmatpush1.msra.mxu0 0.0
  %1398 = vmatprep.subr.mxu0 0.0
  %1399 = vmatpush1.msra.mxu0 0.0
  %1400 = vmatprep.subr.mxu0 0.0
  %1401 = vmatpush1.msra.mxu0 0.0
  %1402 = vmatprep.subr.mxu0 0.0
  %1403 = vmatpush1.msra.mxu0 0.0
  %1404 = vmatprep.subr.mxu0 0.0
  %1405 = vmatpush1.msra.mxu0 0.0
  %1406 = vmatprep.subr.mxu0 0.0
  %1407 = vmatpush1.msra.mxu0 0.0
  %1408 = vmatprep.subr.mxu0 0.0
  %1409 = vmatpush1.msra.mxu0 0.0
  %1410 = vmatprep.subr.mxu0 0.0
  %1411 = vmatpush1.msra.mxu0 0.0
  %1412 = vmatprep.subr.mxu0 0.0
  %1413 = vmatpush1.msra.mxu0 0.0
  %1414 = vmatprep.subr.mxu0 0.0
  %1415 = vmatpush1.msra.mxu0 0.0
  %1416 = vmatprep.subr.mxu0 0.0
  %1417 = vmatpush1.msra.mxu0 0.0
  %1418 = vmatprep.subr.mxu0 0.0
  %1419 = vmatpush1.msra.mxu0 0.0
  %1420 = vmatprep.subr.mxu0 0.0
  %1421 = vmatpush1.msra.mxu0 0.0
  %1422 = vmatprep.subr.mxu0 0.0
  %1423 = vmatpush1.msra.mxu0 0.0
  %1424 = vmatprep.subr.mxu0 0.0
  %1425 = vmatpush1.msra.mxu0 0.0
  %1426 = vmatprep.subr.mxu0 0.0
  %1427 = vmatpush1.msra.mxu0 0.0
  %1428 = vmatprep.subr.mxu0 0.0
  %1429 = vmatpush1.msra.mxu0 0.0
  %1430 = vmatprep.subr.mxu0 0.0
  %1431 = vmatpush1.msra.mxu0 0.0
  %1432 = vmatprep.subr.mxu0 0.0
  %1433 = vmatpush1.msra.mxu0 0.0
  %1434 = vmatprep.subr.mxu0 0.0
  %1435 = vmatpush1.msra.mxu0 0.0
  %1436 = vmatprep.subr.mxu0 0.0
  %1437 = vmatpush1.msra.mxu0 0.0
  %1438 = vmatprep.subr.mxu0 0.0
  %1439 = vmatpush1.msra.mxu0 0.0
  %1440 = vmatprep.subr.mxu0 0.0
  %1441 = vmatpush1.msra.mxu0 0.0
  %1442 = vmatprep.mubr.f32.mxu0 0.0
  %1443 = vmatmul.mubr.f32.gmra.mrb[0].mxu0 %v1376
  %v1444 = vpop.f32.mrb[0].mxu0
  %v1445 = vadd.f32 %v1374, %v1444
  %v1446 = vpop.f32.mrb[0].mxu0
  %1447 = vdwg.mxu0
  %v1448 = vtanh.pop %v1445
  %v1449 = vlaneseq
  %v1450 = vshrl.u32 %v1449, 7
  %v1451 = vsub.s32 0, %v1450
  %v1452 = vrot.slane %v102, %v1451
  %v1454 = vsel %vm358, %v1448, 0
  %1456 = vmatprep.subr.mxu0 0.0
  %1457 = vmatpush1.msra.mxu0 %v72
  %1458 = vmatprep.subr.mxu0 0.0
  %1459 = vmatpush1.msra.mxu0 %v73
  %1460 = vmatprep.subr.mxu0 0.0
  %1461 = vmatpush1.msra.mxu0 %v74
  %1462 = vmatprep.subr.mxu0 0.0
  %1463 = vmatpush1.msra.mxu0 %v75
  %1464 = vmatprep.subr.mxu0 0.0
  %1465 = vmatpush1.msra.mxu0 0.0
  %1466 = vmatprep.subr.mxu0 0.0
  %1467 = vmatpush1.msra.mxu0 0.0
  %1468 = vmatprep.subr.mxu0 0.0
  %1469 = vmatpush1.msra.mxu0 0.0
  %1470 = vmatprep.subr.mxu0 0.0
  %1471 = vmatpush1.msra.mxu0 0.0
  %1472 = vmatprep.subr.mxu0 0.0
  %1473 = vmatpush1.msra.mxu0 0.0
  %1474 = vmatprep.subr.mxu0 0.0
  %1475 = vmatpush1.msra.mxu0 0.0
  %1476 = vmatprep.subr.mxu0 0.0
  %1477 = vmatpush1.msra.mxu0 0.0
  %1478 = vmatprep.subr.mxu0 0.0
  %1479 = vmatpush1.msra.mxu0 0.0
  %1480 = vmatprep.subr.mxu0 0.0
  %1481 = vmatpush1.msra.mxu0 0.0
  %1482 = vmatprep.subr.mxu0 0.0
  %1483 = vmatpush1.msra.mxu0 0.0
  %1484 = vmatprep.subr.mxu0 0.0
  %1485 = vmatpush1.msra.mxu0 0.0
  %1486 = vmatprep.subr.mxu0 0.0
  %1487 = vmatpush1.msra.mxu0 0.0
  %1488 = vmatprep.subr.mxu0 0.0
  %1489 = vmatpush1.msra.mxu0 0.0
  %1490 = vmatprep.subr.mxu0 0.0
  %1491 = vmatpush1.msra.mxu0 0.0
  %1492 = vmatprep.subr.mxu0 0.0
  %1493 = vmatpush1.msra.mxu0 0.0
  %1494 = vmatprep.subr.mxu0 0.0
  %1495 = vmatpush1.msra.mxu0 0.0
  %1496 = vmatprep.subr.mxu0 0.0
  %1497 = vmatpush1.msra.mxu0 0.0
  %1498 = vmatprep.subr.mxu0 0.0
  %1499 = vmatpush1.msra.mxu0 0.0
  %1500 = vmatprep.subr.mxu0 0.0
  %1501 = vmatpush1.msra.mxu0 0.0
  %1502 = vmatprep.subr.mxu0 0.0
  %1503 = vmatpush1.msra.mxu0 0.0
  %1504 = vmatprep.subr.mxu0 0.0
  %1505 = vmatpush1.msra.mxu0 0.0
  %1506 = vmatprep.subr.mxu0 0.0
  %1507 = vmatpush1.msra.mxu0 0.0
  %1508 = vmatprep.subr.mxu0 0.0
  %1509 = vmatpush1.msra.mxu0 0.0
  %1510 = vmatprep.subr.mxu0 0.0
  %1511 = vmatpush1.msra.mxu0 0.0
  %1512 = vmatprep.subr.mxu0 0.0
  %1513 = vmatpush1.msra.mxu0 0.0
  %1514 = vmatprep.subr.mxu0 0.0
  %1515 = vmatpush1.msra.mxu0 0.0
  %1516 = vmatprep.subr.mxu0 0.0
  %1517 = vmatpush1.msra.mxu0 0.0
  %1518 = vmatprep.subr.mxu0 0.0
  %1519 = vmatpush1.msra.mxu0 0.0
  %1520 = vmatprep.mubr.f32.mxu0 0.0
  %1521 = vmatmul.mubr.f32.gmra.mrb[0].mxu0 %v1454
  %v1522 = vpop.f32.mrb[0].mxu0
  %v1523 = vadd.f32 %v1452, %v1522
  %v1524 = vpop.f32.mrb[0].mxu0
  %1525 = vdwg.mxu0
  %1527 = vrot.lane.b32.xlu0 %v595, 24
  %v1528 = vpop.permute.xlu0 %1527
  %1531 = vrot.lane.b32.xlu0 %v605, 24
  %v1532 = vpop.permute.xlu0 %1531
  %1534 = vrot.lane.b32.xlu0 %v574, 104
  %v1535 = vpop.permute.xlu0 %1534
  %1538 = vrot.lane.b32.xlu0 %v1523, 16
  %v1539 = vpop.permute.xlu0 %1538
  %v1541 = vsel %vm358, %v810, %v820
  %v1542 = vsel %vm1273, %v1541, %v1528
  %vm1543 = vcmask 719872
  %v1544 = vsel %vm1543, %v1542, %v1532
  %vm1545 = vcmask 850944
  %v1546 = vsel %vm1545, %v1544, %v1535
  %vm1547 = vcmask 130048
  %v1548 = vsel %vm1547, %v1535, %v1539
  %vm1549 = vcmask 154624
  %v1550 = vsel %vm1549, %v1548, 0.0
  %v1553 = vcombine.low %v1546, %v1550
  %1555 = vst [vmem:[%s3] sm:$0xff] %v1553
  // Predicated region
  $region14: #{model_forward.1} parent=0 // pred_check
    _
  $region15: #{model_forward.1} parent=0 // pred_check_branch
    %1557 = sbr.rel (0) target = $region17
  $region16: #{model_forward.1} parent=0 // pred_region
    _
  $region17: #{model_forward.1} parent=0 // pred_fallthru
    _
  // Predicated region
  $region18: #{model_forward.1} parent=0 // pred_check
    _
  $region19: #{model_forward.1} parent=0 // pred_check_branch
    %1559 = sbr.rel (0) target = $region21
  $region20: #{model_forward.1} parent=0 // pred_region
    _
  $region21: #{model_forward.1} parent=0 // pred_fallthru
    _

</llo_original>
